<compile_context>
chip_gen: v5e
topology: v5e:2x2
jax: 0.10.0
libtpu: 0.0.40
codegen_flags: <defaults>
</compile_context>

<pallas_src>
import functools
import math

import jax
import jax.numpy as jnp
from jax.experimental import pallas as pl
from jax.experimental.pallas import tpu as pltpu


def vit_self_attention_kernel(x_ref, wqkv_ref, bqkv_ref, o_ref, *,
                              num_heads, head_dim):
    """One grid step == one batch element.

    x_ref    : (S, H)   activation dtype (f32 / bf16); matmul inputs stay in it
    wqkv_ref : (H, 3H)  pre-transposed + fused [Wq.T * scale | Wk.T | Wv.T]
    bqkv_ref : (1, 3H)  f32 (bq pre-scaled)
    o_ref    : (S, H)
    """
    S = x_ref.shape[0]
    H = num_heads * head_dim
    x = x_ref[...]                                               # (S, H)

    # Single fused QKV projection on the MXU with f32 accumulation; result is
    # cast back to the activation dtype (matches PyTorch autocast behaviour).
    qkv = (jnp.dot(x, wqkv_ref[...], preferred_element_type=jnp.float32)
           + bqkv_ref[...]).astype(x.dtype)                      # (S, 3H)

    # Head-major (nH, S, d) operands built from lane slices + one major-axis
    # stack, so the attention matmuls below are a single batched dot_general.
    def split_heads(y):                                          # (S, H) -> (nH, S, d)
        return jnp.stack(
            [y[:, h * head_dim:(h + 1) * head_dim] for h in range(num_heads)],
            axis=0)

    q = split_heads(qkv[:, 0 * H:1 * H])
    k = split_heads(qkv[:, 1 * H:2 * H])
    v = split_heads(qkv[:, 2 * H:3 * H])

    # Batched QK^T over all heads (keeps the MXU fed, amortises push/drain).
    # 1/sqrt(head_dim) is already folded into Wq/bq -> no score scaling here.
    scores = jax.lax.dot_general(
        q, k, (((2,), (2,)), ((0,), (0,))),
        preferred_element_type=jnp.float32)                      # (nH, S, S) f32

    # Softmax kept entirely in f32 (v5e has no bf16 VPU/EUP path); the approx
    # reciprocal runs on the otherwise-idle EUP slot.
    m = jnp.max(scores, axis=-1, keepdims=True)
    p = jnp.exp(scores - m)
    p = p * pl.reciprocal(jnp.sum(p, axis=-1, keepdims=True), approx=True)

    # TODO(synk): training-mode dropout on attention probs and the optional
    # head_mask multiply are not implemented (eval mode / head_mask=None).

    # Batched P @ V -> (nH, S, d) contexts.
    ctx = jax.lax.dot_general(
        p.astype(v.dtype), v, (((2,), (1,)), ((0,), (0,))),
        preferred_element_type=jnp.float32)                      # (nH, S, d) f32

    # Assemble the full-width (S, H) block and do ONE lane-dense store instead
    # of per-head masked partial stores.
    out = jnp.concatenate([ctx[h] for h in range(num_heads)], axis=-1)
    o_ref[...] = out.astype(o_ref.dtype)


def fuse_qkv_params(wq, bq, wk, bk, wv, bv, *, num_heads, dtype):
    """One-time (model-init) fusion of the three nn.Linear projections.

    nn.Linear computes y = x @ W.T + b, so the weights are pre-transposed.
    The 1/sqrt(head_dim) attention scale is folded into the query projection.
    Call this ONCE and reuse the fused tensors on every forward (or keep the
    caller under jit so XLA constant-folds it).
    """
    H = wq.shape[1]
    scale = 1.0 / math.sqrt(H // num_heads)
    wqkv = jnp.concatenate([wq.T * scale, wk.T, wv.T], axis=1).astype(dtype)
    bqkv = jnp.concatenate([bq * scale, bk, bv]).reshape(1, 3 * H).astype(jnp.float32)
    return wqkv, bqkv


def _vmem_limit_bytes(S, H, num_heads, act_itemsize, single_buffer_weights):
    """Rough VMEM footprint of one grid step, with 2x headroom."""
    head_dim = H // num_heads
    wbuf = 1 if single_buffer_weights else 2
    weights = wbuf * (H * 3 * H * act_itemsize + 3 * H * 4)
    io = 2 * 2 * S * H * act_itemsize            # double-buffered x / out blocks
    qkv = S * 3 * H * 4                          # f32 projection accumulator
    heads = 3 * num_heads * S * head_dim * act_itemsize
    attn = 2 * num_heads * S * S * 4             # scores + probs (f32)
    ctx = num_heads * S * head_dim * 4 + S * H * 4
    est = weights + io + qkv + heads + attn + ctx
    # Floor of 32 MiB (safe on every generation, leaves headroom on v7x's
    # 64 MiB), cap below v5e/v6e physical VMEM for very large f32 configs.
    return int(min(112 * 2 ** 20, max(32 * 2 ** 20, 2 * est)))


def _build_attention_call(B, S, H, dtype, *, num_heads, single_buffer_weights):
    head_dim = H // num_heads
    act_itemsize = jnp.dtype(dtype).itemsize

    kernel = functools.partial(vit_self_attention_kernel,
                               num_heads=num_heads, head_dim=head_dim)

    # Constant-index weight/bias blocks: a single VMEM buffer suffices (there
    # is nothing to prefetch), halving the dominant VMEM consumer.
    const_kwargs = {"pipeline_mode": pl.Buffered(1)} if single_buffer_weights else {}

    flops = 2 * B * S * (3 * H) * H + 4 * B * num_heads * S * S * head_dim
    transcendentals = B * num_heads * S * S
    bytes_accessed = (2 * B * S * H * act_itemsize      # x in, out
                      + H * 3 * H * act_itemsize        # fused weights
                      + 3 * H * 4)                      # fused bias

    return pl.pallas_call(
        kernel,
        out_shape=jax.ShapeDtypeStruct((B, S, H), dtype),
        grid=(B,),
        in_specs=[
            pl.BlockSpec((None, S, H), lambda b: (b, 0, 0)),                # x
            pl.BlockSpec((H, 3 * H), lambda b: (0, 0), **const_kwargs),     # W_qkv
            pl.BlockSpec((1, 3 * H), lambda b: (0, 0), **const_kwargs),     # b_qkv
        ],
        out_specs=pl.BlockSpec((None, S, H), lambda b: (b, 0, 0)),
        # TODO(synk): for B==1 on dual-TensorCore parts (v7x), add a second
        # parallel grid axis over query tiles / head groups (with the QKV
        # projection cached) so both cores are busy; irrelevant on v5e/v6e.
        compiler_params=pltpu.CompilerParams(
            dimension_semantics=("parallel",),
            vmem_limit_bytes=_vmem_limit_bytes(S, H, num_heads, act_itemsize,
                                               single_buffer_weights)),
        cost_estimate=pl.CostEstimate(flops=int(flops),
                                      transcendentals=int(transcendentals),
                                      bytes_accessed=int(bytes_accessed)),
    )


def vit_self_attention(x, wqkv, bqkv, *, num_heads):
    """x: (B, S, H) in f32 or bf16; wqkv/bqkv come from `fuse_qkv_params`."""
    B, S, H = x.shape
    try:
        call = _build_attention_call(B, S, H, x.dtype, num_heads=num_heads,
                                     single_buffer_weights=True)
        return call(x, wqkv, bqkv)
    except Exception:
        # Some JAX builds may reject pipeline_mode=pl.Buffered(1) on the TPU
        # pallas_call path; fall back to default double-buffered weight blocks.
        call = _build_attention_call(B, S, H, x.dtype, num_heads=num_heads,
                                     single_buffer_weights=False)
        return call(x, wqkv, bqkv)


def _reference(x, wq, bq, wk, bk, wv, bv, num_heads):
    """Pure-JAX mirror of the PyTorch forward (eval mode, no head_mask)."""
    B, S, H = x.shape
    d = H // num_heads

    def proj(w, b):
        y = jnp.einsum("bsh,oh->bso", x, w) + b
        return y.reshape(B, S, num_heads, d).transpose(0, 2, 1, 3)   # (B,nH,S,d)

    q, k, v = proj(wq, bq), proj(wk, bk), proj(wv, bv)
    scores = jnp.einsum("bhqd,bhkd->bhqk", q, k) / math.sqrt(d)
    probs = jax.nn.softmax(scores, axis=-1)
    ctx = jnp.einsum("bhqk,bhkd->bhqd", probs, v)
    return ctx.transpose(0, 2, 1, 3).reshape(B, S, H)


if __name__ == "__main__":
    # Small config consistent with the module: hidden_size=32, num_heads=4.
    B, S, H = 2, 8, 32
    NUM_HEADS = 4

    key = jax.random.PRNGKey(0)
    kx, kq, kbq, kk, kbk, kv, kbv = jax.random.split(key, 7)

    bound = 1.0 / math.sqrt(H)
    x = jax.random.normal(kx, (B, S, H), dtype=jnp.float32)
    wq = jax.random.uniform(kq, (H, H), jnp.float32, -bound, bound)
    bq = jax.random.uniform(kbq, (H,), jnp.float32, -bound, bound)
    wk = jax.random.uniform(kk, (H, H), jnp.float32, -bound, bound)
    bk = jax.random.uniform(kbk, (H,), jnp.float32, -bound, bound)
    wv = jax.random.uniform(kv, (H, H), jnp.float32, -bound, bound)
    bv = jax.random.uniform(kbv, (H,), jnp.float32, -bound, bound)

    ref = _reference(x, wq, bq, wk, bk, wv, bv, NUM_HEADS)

    # --- f32 path (PyTorch default dtype): tight check. ---
    wqkv32, bqkv32 = fuse_qkv_params(wq, bq, wk, bk, wv, bv,
                                     num_heads=NUM_HEADS, dtype=jnp.float32)
    out32 = jax.block_until_ready(
        vit_self_attention(x, wqkv32, bqkv32, num_heads=NUM_HEADS))
    assert out32.shape == (B, S, H)
    # Tolerance covers the EUP approximate reciprocal in the softmax.
    assert jnp.allclose(out32, ref, atol=2e-3, rtol=2e-3), (
        f"f32 mismatch vs reference; max abs err = "
        f"{float(jnp.max(jnp.abs(out32 - ref)))}")

    # --- bf16 path (MXU-native matmul dtype, f32 accumulation + f32 softmax). ---
    wqkv16, bqkv16 = fuse_qkv_params(wq, bq, wk, bk, wv, bv,
                                     num_heads=NUM_HEADS, dtype=jnp.bfloat16)
    out16 = jax.block_until_ready(
        vit_self_attention(x.astype(jnp.bfloat16), wqkv16, bqkv16,
                           num_heads=NUM_HEADS))
    assert out16.dtype == jnp.bfloat16
    assert jnp.allclose(out16.astype(jnp.float32), ref, atol=5e-2, rtol=5e-2), (
        "bf16 mismatch vs reference; max abs err = "
        f"{float(jnp.max(jnp.abs(out16.astype(jnp.float32) - ref)))}")

    print("KERNEL_OK")
</pallas_src>

<mosaic_0001>
module attributes {stable_mosaic.version = 11 : i64} {
  func.func @vit_self_attention_kernel(%arg0: i32, %arg1: memref<1x8x32xf32, #tpu.memory_space<vmem>>, %arg2: memref<32x96xf32, #tpu.memory_space<vmem>>, %arg3: memref<1x96xf32, #tpu.memory_space<vmem>>, %arg4: memref<1x8x32xf32, #tpu.memory_space<vmem>>) attributes {dimension_semantics = [#tpu.dimension_semantics<parallel>], iteration_bounds = array<i64: 2>, scalar_prefetch = 0 : i64, scratch_operands = 0 : i64, tpu.core_type = #tpu.core_type<tc>, window_params = [{transform_indices = @transform_0, window_bounds = array<i64: 1, 8, 32>}, {pipeline_mode = #tpu.pipeline_mode<synchronous>, transform_indices = @transform_1, window_bounds = array<i64: 32, 96>}, {pipeline_mode = #tpu.pipeline_mode<synchronous>, transform_indices = @transform_2, window_bounds = array<i64: 1, 96>}, {transform_indices = @transform_3, window_bounds = array<i64: 1, 8, 32>}]} {
    %c0 = arith.constant 0 : index
    %c0_0 = arith.constant 0 : index
    %c0_1 = arith.constant 0 : index
    %0 = vector.load %arg1[%c0, %c0_0, %c0_1] : memref<1x8x32xf32, #tpu.memory_space<vmem>>, vector<1x8x32xf32>
    %1 = vector.shape_cast %0 : vector<1x8x32xf32> to vector<8x32xf32>
    %c0_2 = arith.constant 0 : index
    %c0_3 = arith.constant 0 : index
    %2 = vector.load %arg2[%c0_2, %c0_3] : memref<32x96xf32, #tpu.memory_space<vmem>>, vector<32x96xf32>
    %cst = arith.constant dense<0.000000e+00> : vector<8x96xf32>
    %3 = tpu.matmul %1, %2, %cst {dimension_numbers = #tpu.dot_dimension_numbers<[1], [0], [0], [1], [0, 0, 1, 1], [], []>} : vector<8x32xf32>, vector<32x96xf32>, vector<8x96xf32> -> vector<8x96xf32>
    %c0_4 = arith.constant 0 : index
    %c0_5 = arith.constant 0 : index
    %4 = vector.load %arg3[%c0_4, %c0_5] : memref<1x96xf32, #tpu.memory_space<vmem>>, vector<1x96xf32>
    %5 = vector.broadcast %4 : vector<1x96xf32> to vector<8x96xf32>
    %6 = arith.addf %3, %5 : vector<8x96xf32>
    %7 = vector.extract_strided_slice %6 {offsets = [0, 0], sizes = [8, 32], strides = [1, 1]} : vector<8x96xf32> to vector<8x32xf32>
    %8 = vector.extract_strided_slice %7 {offsets = [0, 0], sizes = [8, 8], strides = [1, 1]} : vector<8x32xf32> to vector<8x8xf32>
    %9 = vector.extract_strided_slice %7 {offsets = [0, 8], sizes = [8, 8], strides = [1, 1]} : vector<8x32xf32> to vector<8x8xf32>
    %10 = vector.extract_strided_slice %7 {offsets = [0, 16], sizes = [8, 8], strides = [1, 1]} : vector<8x32xf32> to vector<8x8xf32>
    %11 = vector.extract_strided_slice %7 {offsets = [0, 24], sizes = [8, 8], strides = [1, 1]} : vector<8x32xf32> to vector<8x8xf32>
    %12 = vector.shape_cast %8 : vector<8x8xf32> to vector<1x8x8xf32>
    %13 = vector.shape_cast %9 : vector<8x8xf32> to vector<1x8x8xf32>
    %14 = vector.shape_cast %10 : vector<8x8xf32> to vector<1x8x8xf32>
    %15 = vector.shape_cast %11 : vector<8x8xf32> to vector<1x8x8xf32>
    %16 = tpu.concatenate %12, %13, %14, %15 in 0 : vector<1x8x8xf32>, vector<1x8x8xf32>, vector<1x8x8xf32>, vector<1x8x8xf32> -> vector<4x8x8xf32>
    %17 = vector.extract_strided_slice %6 {offsets = [0, 32], sizes = [8, 32], strides = [1, 1]} : vector<8x96xf32> to vector<8x32xf32>
    %18 = vector.extract_strided_slice %17 {offsets = [0, 0], sizes = [8, 8], strides = [1, 1]} : vector<8x32xf32> to vector<8x8xf32>
    %19 = vector.extract_strided_slice %17 {offsets = [0, 8], sizes = [8, 8], strides = [1, 1]} : vector<8x32xf32> to vector<8x8xf32>
    %20 = vector.extract_strided_slice %17 {offsets = [0, 16], sizes = [8, 8], strides = [1, 1]} : vector<8x32xf32> to vector<8x8xf32>
    %21 = vector.extract_strided_slice %17 {offsets = [0, 24], sizes = [8, 8], strides = [1, 1]} : vector<8x32xf32> to vector<8x8xf32>
    %22 = vector.shape_cast %18 : vector<8x8xf32> to vector<1x8x8xf32>
    %23 = vector.shape_cast %19 : vector<8x8xf32> to vector<1x8x8xf32>
    %24 = vector.shape_cast %20 : vector<8x8xf32> to vector<1x8x8xf32>
    %25 = vector.shape_cast %21 : vector<8x8xf32> to vector<1x8x8xf32>
    %26 = tpu.concatenate %22, %23, %24, %25 in 0 : vector<1x8x8xf32>, vector<1x8x8xf32>, vector<1x8x8xf32>, vector<1x8x8xf32> -> vector<4x8x8xf32>
    %27 = vector.extract_strided_slice %6 {offsets = [0, 64], sizes = [8, 32], strides = [1, 1]} : vector<8x96xf32> to vector<8x32xf32>
    %28 = vector.extract_strided_slice %27 {offsets = [0, 0], sizes = [8, 8], strides = [1, 1]} : vector<8x32xf32> to vector<8x8xf32>
    %29 = vector.extract_strided_slice %27 {offsets = [0, 8], sizes = [8, 8], strides = [1, 1]} : vector<8x32xf32> to vector<8x8xf32>
    %30 = vector.extract_strided_slice %27 {offsets = [0, 16], sizes = [8, 8], strides = [1, 1]} : vector<8x32xf32> to vector<8x8xf32>
    %31 = vector.extract_strided_slice %27 {offsets = [0, 24], sizes = [8, 8], strides = [1, 1]} : vector<8x32xf32> to vector<8x8xf32>
    %32 = vector.shape_cast %28 : vector<8x8xf32> to vector<1x8x8xf32>
    %33 = vector.shape_cast %29 : vector<8x8xf32> to vector<1x8x8xf32>
    %34 = vector.shape_cast %30 : vector<8x8xf32> to vector<1x8x8xf32>
    %35 = vector.shape_cast %31 : vector<8x8xf32> to vector<1x8x8xf32>
    %36 = tpu.concatenate %32, %33, %34, %35 in 0 : vector<1x8x8xf32>, vector<1x8x8xf32>, vector<1x8x8xf32>, vector<1x8x8xf32> -> vector<4x8x8xf32>
    %cst_6 = arith.constant dense<0.000000e+00> : vector<4x8x8xf32>
    %37 = tpu.matmul %16, %26, %cst_6 {dimension_numbers = #tpu.dot_dimension_numbers<[2], [2], [1], [1], [0, 0, 0, 1, 1, 1], [0], [0]>} : vector<4x8x8xf32>, vector<4x8x8xf32>, vector<4x8x8xf32> -> vector<4x8x8xf32>
    %cst_7 = arith.constant dense<0xFF800000> : vector<4x8xf32>
    %38 = vector.multi_reduction <maximumf>, %37, %cst_7 [2] : vector<4x8x8xf32> to vector<4x8xf32>
    %39 = vector.shape_cast %38 : vector<4x8xf32> to vector<4x8x1xf32>
    %40 = vector.broadcast %39 : vector<4x8x1xf32> to vector<4x8x8xf32>
    %41 = arith.subf %37, %40 : vector<4x8x8xf32>
    %42 = math.exp %41 : vector<4x8x8xf32>
    %cst_8 = arith.constant dense<0.000000e+00> : vector<4x8xf32>
    %43 = vector.multi_reduction <add>, %42, %cst_8 [2] : vector<4x8x8xf32> to vector<4x8xf32>
    %44 = vector.shape_cast %43 : vector<4x8xf32> to vector<4x8x1xf32>
    %45 = tpu.reciprocal %44 {approx = true} : vector<4x8x1xf32> -> vector<4x8x1xf32>
    %46 = vector.broadcast %45 : vector<4x8x1xf32> to vector<4x8x8xf32>
    %47 = arith.mulf %42, %46 : vector<4x8x8xf32>
    %cst_9 = arith.constant dense<0.000000e+00> : vector<4x8x8xf32>
    %48 = tpu.matmul %47, %36, %cst_9 {dimension_numbers = #tpu.dot_dimension_numbers<[2], [1], [1], [2], [0, 0, 0, 1, 1, 2], [0], [0]>} : vector<4x8x8xf32>, vector<4x8x8xf32>, vector<4x8x8xf32> -> vector<4x8x8xf32>
    %49 = vector.extract_strided_slice %48 {offsets = [0, 0, 0], sizes = [1, 8, 8], strides = [1, 1, 1]} : vector<4x8x8xf32> to vector<1x8x8xf32>
    %50 = vector.shape_cast %49 : vector<1x8x8xf32> to vector<8x8xf32>
    %51 = vector.extract_strided_slice %48 {offsets = [1, 0, 0], sizes = [1, 8, 8], strides = [1, 1, 1]} : vector<4x8x8xf32> to vector<1x8x8xf32>
    %52 = vector.shape_cast %51 : vector<1x8x8xf32> to vector<8x8xf32>
    %53 = vector.extract_strided_slice %48 {offsets = [2, 0, 0], sizes = [1, 8, 8], strides = [1, 1, 1]} : vector<4x8x8xf32> to vector<1x8x8xf32>
    %54 = vector.shape_cast %53 : vector<1x8x8xf32> to vector<8x8xf32>
    %55 = vector.extract_strided_slice %48 {offsets = [3, 0, 0], sizes = [1, 8, 8], strides = [1, 1, 1]} : vector<4x8x8xf32> to vector<1x8x8xf32>
    %56 = vector.shape_cast %55 : vector<1x8x8xf32> to vector<8x8xf32>
    %57 = tpu.concatenate %50, %52, %54, %56 in 1 : vector<8x8xf32>, vector<8x8xf32>, vector<8x8xf32>, vector<8x8xf32> -> vector<8x32xf32>
    %c0_10 = arith.constant 0 : index
    %c0_11 = arith.constant 0 : index
    %c0_12 = arith.constant 0 : index
    %58 = vector.load %arg4[%c0_10, %c0_11, %c0_12] : memref<1x8x32xf32, #tpu.memory_space<vmem>>, vector<1x8x32xf32>
    %59 = vector.shape_cast %58 : vector<1x8x32xf32> to vector<8x32xf32>
    %60 = vector.shape_cast %57 : vector<8x32xf32> to vector<1x8x32xf32>
    tpu.vector_store %arg4[%c0_10, %c0_11, %c0_12], %60 {strides = array<i32>} : memref<1x8x32xf32, #tpu.memory_space<vmem>>, vector<1x8x32xf32>,
    return
  }
  func.func @transform_0(%arg0: i32) -> (i32, i32, i32) {
    %c0_i32 = arith.constant 0 : i32
    %c0_i32_0 = arith.constant 0 : i32
    %c0_i32_1 = arith.constant 0 : i32
    return %arg0, %c0_i32, %c0_i32_0 : i32, i32, i32
  }
  func.func @transform_1(%arg0: i32) -> (i32, i32) {
    %c0_i32 = arith.constant 0 : i32
    %c0_i32_0 = arith.constant 0 : i32
    %c0_i32_1 = arith.constant 0 : i32
    return %c0_i32, %c0_i32_0 : i32, i32
  }
  func.func @transform_2(%arg0: i32) -> (i32, i32) {
    %c0_i32 = arith.constant 0 : i32
    %c0_i32_0 = arith.constant 0 : i32
    %c0_i32_1 = arith.constant 0 : i32
    return %c0_i32, %c0_i32_0 : i32, i32
  }
  func.func @transform_3(%arg0: i32) -> (i32, i32, i32) {
    %c0_i32 = arith.constant 0 : i32
    %c0_i32_0 = arith.constant 0 : i32
    %c0_i32_1 = arith.constant 0 : i32
    return %arg0, %c0_i32, %c0_i32_0 : i32, i32, i32
  }
}

module attributes {stable_mosaic.version = 11 : i64} {
  func.func @vit_self_attention_kernel(%arg0: i32, %arg1: memref<1x8x32xf32, #tpu.memory_space<vmem>>, %arg2: memref<32x96xf32, #tpu.memory_space<vmem>>, %arg3: memref<1x96xf32, #tpu.memory_space<vmem>>, %arg4: memref<1x8x32xf32, #tpu.memory_space<vmem>>) attributes {dimension_semantics = [#tpu.dimension_semantics<parallel>], iteration_bounds = array<i64: 2>, scalar_prefetch = 0 : i64, scratch_operands = 0 : i64, tpu.core_type = #tpu.core_type<tc>, window_params = [{transform_indices = @transform_0, window_bounds = array<i64: 1, 8, 32>}, {pipeline_mode = #tpu.pipeline_mode<synchronous>, transform_indices = @transform_1, window_bounds = array<i64: 32, 96>}, {pipeline_mode = #tpu.pipeline_mode<synchronous>, transform_indices = @transform_2, window_bounds = array<i64: 1, 96>}, {transform_indices = @transform_3, window_bounds = array<i64: 1, 8, 32>}]} {
    %c0 = arith.constant 0 : index
    %c0_0 = arith.constant 0 : index
    %c0_1 = arith.constant 0 : index
    %0 = vector.load %arg1[%c0, %c0_0, %c0_1] : memref<1x8x32xf32, #tpu.memory_space<vmem>>, vector<1x8x32xf32>
    %1 = vector.shape_cast %0 : vector<1x8x32xf32> to vector<8x32xf32>
    %c0_2 = arith.constant 0 : index
    %c0_3 = arith.constant 0 : index
    %2 = vector.load %arg2[%c0_2, %c0_3] : memref<32x96xf32, #tpu.memory_space<vmem>>, vector<32x96xf32>
    %cst = arith.constant dense<0.000000e+00> : vector<8x96xf32>
    %3 = tpu.matmul %1, %2, %cst {dimension_numbers = #tpu.dot_dimension_numbers<[1], [0], [0], [1], [0, 0, 1, 1], [], []>} : vector<8x32xf32>, vector<32x96xf32>, vector<8x96xf32> -> vector<8x96xf32>
    %c0_4 = arith.constant 0 : index
    %c0_5 = arith.constant 0 : index
    %4 = vector.load %arg3[%c0_4, %c0_5] : memref<1x96xf32, #tpu.memory_space<vmem>>, vector<1x96xf32>
    %5 = vector.broadcast %4 : vector<1x96xf32> to vector<8x96xf32>
    %6 = arith.addf %3, %5 : vector<8x96xf32>
    %7 = vector.extract_strided_slice %6 {offsets = [0, 0], sizes = [8, 32], strides = [1, 1]} : vector<8x96xf32> to vector<8x32xf32>
    %8 = vector.extract_strided_slice %7 {offsets = [0, 0], sizes = [8, 8], strides = [1, 1]} : vector<8x32xf32> to vector<8x8xf32>
    %9 = vector.extract_strided_slice %7 {offsets = [0, 8], sizes = [8, 8], strides = [1, 1]} : vector<8x32xf32> to vector<8x8xf32>
    %10 = vector.extract_strided_slice %7 {offsets = [0, 16], sizes = [8, 8], strides = [1, 1]} : vector<8x32xf32> to vector<8x8xf32>
    %11 = vector.extract_strided_slice %7 {offsets = [0, 24], sizes = [8, 8], strides = [1, 1]} : vector<8x32xf32> to vector<8x8xf32>
    %12 = vector.shape_cast %8 : vector<8x8xf32> to vector<1x8x8xf32>
    %13 = vector.shape_cast %9 : vector<8x8xf32> to vector<1x8x8xf32>
    %14 = vector.shape_cast %10 : vector<8x8xf32> to vector<1x8x8xf32>
    %15 = vector.shape_cast %11 : vector<8x8xf32> to vector<1x8x8xf32>
    %16 = tpu.concatenate %12, %13, %14, %15 in 0 : vector<1x8x8xf32>, vector<1x8x8xf32>, vector<1x8x8xf32>, vector<1x8x8xf32> -> vector<4x8x8xf32>
    %17 = vector.extract_strided_slice %6 {offsets = [0, 32], sizes = [8, 32], strides = [1, 1]} : vector<8x96xf32> to vector<8x32xf32>
    %18 = vector.extract_strided_slice %17 {offsets = [0, 0], sizes = [8, 8], strides = [1, 1]} : vector<8x32xf32> to vector<8x8xf32>
    %19 = vector.extract_strided_slice %17 {offsets = [0, 8], sizes = [8, 8], strides = [1, 1]} : vector<8x32xf32> to vector<8x8xf32>
    %20 = vector.extract_strided_slice %17 {offsets = [0, 16], sizes = [8, 8], strides = [1, 1]} : vector<8x32xf32> to vector<8x8xf32>
    %21 = vector.extract_strided_slice %17 {offsets = [0, 24], sizes = [8, 8], strides = [1, 1]} : vector<8x32xf32> to vector<8x8xf32>
    %22 = vector.shape_cast %18 : vector<8x8xf32> to vector<1x8x8xf32>
    %23 = vector.shape_cast %19 : vector<8x8xf32> to vector<1x8x8xf32>
    %24 = vector.shape_cast %20 : vector<8x8xf32> to vector<1x8x8xf32>
    %25 = vector.shape_cast %21 : vector<8x8xf32> to vector<1x8x8xf32>
    %26 = tpu.concatenate %22, %23, %24, %25 in 0 : vector<1x8x8xf32>, vector<1x8x8xf32>, vector<1x8x8xf32>, vector<1x8x8xf32> -> vector<4x8x8xf32>
    %27 = vector.extract_strided_slice %6 {offsets = [0, 64], sizes = [8, 32], strides = [1, 1]} : vector<8x96xf32> to vector<8x32xf32>
    %28 = vector.extract_strided_slice %27 {offsets = [0, 0], sizes = [8, 8], strides = [1, 1]} : vector<8x32xf32> to vector<8x8xf32>
    %29 = vector.extract_strided_slice %27 {offsets = [0, 8], sizes = [8, 8], strides = [1, 1]} : vector<8x32xf32> to vector<8x8xf32>
    %30 = vector.extract_strided_slice %27 {offsets = [0, 16], sizes = [8, 8], strides = [1, 1]} : vector<8x32xf32> to vector<8x8xf32>
    %31 = vector.extract_strided_slice %27 {offsets = [0, 24], sizes = [8, 8], strides = [1, 1]} : vector<8x32xf32> to vector<8x8xf32>
    %32 = vector.shape_cast %28 : vector<8x8xf32> to vector<1x8x8xf32>
    %33 = vector.shape_cast %29 : vector<8x8xf32> to vector<1x8x8xf32>
    %34 = vector.shape_cast %30 : vector<8x8xf32> to vector<1x8x8xf32>
    %35 = vector.shape_cast %31 : vector<8x8xf32> to vector<1x8x8xf32>
    %36 = tpu.concatenate %32, %33, %34, %35 in 0 : vector<1x8x8xf32>, vector<1x8x8xf32>, vector<1x8x8xf32>, vector<1x8x8xf32> -> vector<4x8x8xf32>
    %cst_6 = arith.constant dense<0.000000e+00> : vector<4x8x8xf32>
    %37 = tpu.matmul %16, %26, %cst_6 {dimension_numbers = #tpu.dot_dimension_numbers<[2], [2], [1], [1], [0, 0, 0, 1, 1, 1], [0], [0]>} : vector<4x8x8xf32>, vector<4x8x8xf32>, vector<4x8x8xf32> -> vector<4x8x8xf32>
    %cst_7 = arith.constant dense<0xFF800000> : vector<4x8xf32>
    %38 = vector.multi_reduction <maximumf>, %37, %cst_7 [2] : vector<4x8x8xf32> to vector<4x8xf32>
    %39 = vector.shape_cast %38 : vector<4x8xf32> to vector<4x8x1xf32>
    %40 = vector.broadcast %39 : vector<4x8x1xf32> to vector<4x8x8xf32>
    %41 = arith.subf %37, %40 : vector<4x8x8xf32>
    %42 = math.exp %41 : vector<4x8x8xf32>
    %cst_8 = arith.constant dense<0.000000e+00> : vector<4x8xf32>
    %43 = vector.multi_reduction <add>, %42, %cst_8 [2] : vector<4x8x8xf32> to vector<4x8xf32>
    %44 = vector.shape_cast %43 : vector<4x8xf32> to vector<4x8x1xf32>
    %45 = tpu.reciprocal %44 {approx = true} : vector<4x8x1xf32> -> vector<4x8x1xf32>
    %46 = vector.broadcast %45 : vector<4x8x1xf32> to vector<4x8x8xf32>
    %47 = arith.mulf %42, %46 : vector<4x8x8xf32>
    %cst_9 = arith.constant dense<0.000000e+00> : vector<4x8x8xf32>
    %48 = tpu.matmul %47, %36, %cst_9 {dimension_numbers = #tpu.dot_dimension_numbers<[2], [1], [1], [2], [0, 0, 0, 1, 1, 2], [0], [0]>} : vector<4x8x8xf32>, vector<4x8x8xf32>, vector<4x8x8xf32> -> vector<4x8x8xf32>
    %49 = vector.extract_strided_slice %48 {offsets = [0, 0, 0], sizes = [1, 8, 8], strides = [1, 1, 1]} : vector<4x8x8xf32> to vector<1x8x8xf32>
    %50 = vector.shape_cast %49 : vector<1x8x8xf32> to vector<8x8xf32>
    %51 = vector.extract_strided_slice %48 {offsets = [1, 0, 0], sizes = [1, 8, 8], strides = [1, 1, 1]} : vector<4x8x8xf32> to vector<1x8x8xf32>
    %52 = vector.shape_cast %51 : vector<1x8x8xf32> to vector<8x8xf32>
    %53 = vector.extract_strided_slice %48 {offsets = [2, 0, 0], sizes = [1, 8, 8], strides = [1, 1, 1]} : vector<4x8x8xf32> to vector<1x8x8xf32>
    %54 = vector.shape_cast %53 : vector<1x8x8xf32> to vector<8x8xf32>
    %55 = vector.extract_strided_slice %48 {offsets = [3, 0, 0], sizes = [1, 8, 8], strides = [1, 1, 1]} : vector<4x8x8xf32> to vector<1x8x8xf32>
    %56 = vector.shape_cast %55 : vector<1x8x8xf32> to vector<8x8xf32>
    %57 = tpu.concatenate %50, %52, %54, %56 in 1 : vector<8x8xf32>, vector<8x8xf32>, vector<8x8xf32>, vector<8x8xf32> -> vector<8x32xf32>
    %c0_10 = arith.constant 0 : index
    %c0_11 = arith.constant 0 : index
    %c0_12 = arith.constant 0 : index
    %58 = vector.load %arg4[%c0_10, %c0_11, %c0_12] : memref<1x8x32xf32, #tpu.memory_space<vmem>>, vector<1x8x32xf32>
    %59 = vector.shape_cast %58 : vector<1x8x32xf32> to vector<8x32xf32>
    %60 = vector.shape_cast %57 : vector<8x32xf32> to vector<1x8x32xf32>
    tpu.vector_store %arg4[%c0_10, %c0_11, %c0_12], %60 {strides = array<i32>} : memref<1x8x32xf32, #tpu.memory_space<vmem>>, vector<1x8x32xf32>,
    return
  }
  func.func @transform_0(%arg0: i32) -> (i32, i32, i32) {
    %c0_i32 = arith.constant 0 : i32
    %c0_i32_0 = arith.constant 0 : i32
    %c0_i32_1 = arith.constant 0 : i32
    return %arg0, %c0_i32, %c0_i32_0 : i32, i32, i32
  }
  func.func @transform_1(%arg0: i32) -> (i32, i32) {
    %c0_i32 = arith.constant 0 : i32
    %c0_i32_0 = arith.constant 0 : i32
    %c0_i32_1 = arith.constant 0 : i32
    return %c0_i32, %c0_i32_0 : i32, i32
  }
  func.func @transform_2(%arg0: i32) -> (i32, i32) {
    %c0_i32 = arith.constant 0 : i32
    %c0_i32_0 = arith.constant 0 : i32
    %c0_i32_1 = arith.constant 0 : i32
    return %c0_i32, %c0_i32_0 : i32, i32
  }
  func.func @transform_3(%arg0: i32) -> (i32, i32, i32) {
    %c0_i32 = arith.constant 0 : i32
    %c0_i32_0 = arith.constant 0 : i32
    %c0_i32_1 = arith.constant 0 : i32
    return %arg0, %c0_i32, %c0_i32_0 : i32, i32, i32
  }
}

</mosaic_0001>

<llo_original>
// kernel: tpu_custom_call.1
$region0: #{tpu_custom_call.1}
  #allocation0 [shape = 'u32[]', space=smem, size = 0x4, offset = 0x4, fixed_abs, tag = 'smem constant byte address 0x4 - core index']
  #allocation1 [shape = 'u32[72,128]{1,0:T(1,128)}', space=vmem, size = 0x9000, scoped, tag = 'internal scratch']
  %s0 = inlined_call_operand.hbm [shape: f32[2,8,32], index: 0, kind: input, shape index: {}]
  %s1 = inlined_call_operand.hbm [shape: f32[32,96], index: 1, kind: input, shape index: {}]
  %s2 = inlined_call_operand.vmem [shape: f32[1,96], index: 2, kind: input, shape index: {}]
  %s3 = inlined_call_operand.hbm [shape: f32[2,8,32], index: 3, kind: output, shape index: {}]
  %s4 = sld [smem:[#allocation0]]
  $region53: #{tpu_custom_call.1} parent=0
    _
  %s6 = ssub.s32 1, %s4
  %s7 = scalar_select 0, %s6, %s4
  $region1: #{tpu_custom_call.1} parent=0
    #allocation2 [shape = 'u8[8192]{0}', space=vmem, size = 0x2000, scoped, tag = 'input window, operand 0']
    #allocation3 [shape = 's32[2]{0}', space=sflag, size = 0x8, scoped, tag = 'scoped memory for tpu_custom_call.1']
    #allocation4 [shape = 's32[2]{0}', space=sflag, size = 0x8, scoped, tag = 'scoped memory for tpu_custom_call.1']
    #allocation5 [shape = 'u8[16384]{0}', space=vmem, size = 0x4000, scoped, tag = 'input window, operand 1, single buffered']
    #allocation6 [shape = 's32[1]{0}', space=sflag, size = 0x4, scoped, tag = 'scoped memory for tpu_custom_call.1']
    #allocation7 [shape = 'u8[8192]{0}', space=vmem, size = 0x2000, scoped, tag = 'output window, operand 0']
    %8 = vsyncpa [#allocation3], 0
    %s9 = scalar_lea.sflag [#allocation3], 1
    %10 = vsyncpa %s9, 0
    %11 = vsyncpa [#allocation6], 0
    %12 = vsyncpa [#allocation4], 0
    %s13 = scalar_lea.sflag [#allocation4], 1
    %14 = vsyncpa %s13, 0
    loop: start=0, step=1, limit=4
    $region2: #{tpu_custom_call.1} parent=1 // loop_pre_header
      _
    $region3: #{tpu_custom_call.1} parent=1 // loop_header
      %s16 = sphi 0, %s20
      %p17 = scmp.ge.s32.totalorder %s16, 4
      %s26 = sphi 0, %s28
      %s29 = sphi 0, %s26
      %s30 = sphi 0, %s29
      %s46 = sphi 0, %s30
      %s50 = sphi 0, %s50
      %s52 = sphi 0, %s50
      %s53 = sphi 0, %s52
      %s67 = sphi 0, %s53
      %s71 = sphi 0, %s71
      %s73 = sphi 0, %s71
      %s74 = sphi 0, %s73
      %s88 = sphi 0, %s74
      %s94 = sphi 0, %s96
      %s97 = sphi 0, %s94
      %s98 = sphi 0, %s97
      %s114 = sphi 0, %s98
    $region4: #{tpu_custom_call.1} parent=1 // loop_header_branch
      %19 = sbr.rel (%p17) target = $region8
    $region5: #{tpu_custom_call.1} parent=1 // loop_body
      %s21 = ssub.s32 %s16, 1
      %s22 = ssub.s32 %s16, 2
      %s23 = sadd.s32 %s16, 1
      %s24 = ssub.s32 %s16, %s23
      %p25 = scmp.eq.s32.totalorder %s24, 0
      %s27 = sadd.s32 %s26, 1
      %s28 = scalar_select %p25, %s26, %s27
      %p31 = pneg %p25
      %p32 = scmp.eq.s32.totalorder %s16, 1
      %p33 = por %p31, %p32
      %p34 = scmp.ne.s32.totalorder %s26, %s29
      %p35 = scmp.eq.s32.totalorder %s16, 0
      %p36 = por %p34, %p35
      %p37 = scmp.ne.s32.totalorder %s26, %s29
      %p38 = scmp.eq.s32.totalorder %s21, 1
      %p39 = por %p37, %p38
      %p40 = scmp.ne.s32.totalorder %s29, %s30
      %p41 = scmp.eq.s32.totalorder %s21, 0
      %p42 = por %p40, %p41
      %p43 = scmp.ne.s32.totalorder %s29, %s30
      %p44 = scmp.eq.s32.totalorder %s22, 1
      %p45 = por %p43, %p44
      %p47 = scmp.ne.s32.totalorder %s30, %s46
      %p48 = scmp.eq.s32.totalorder %s22, 0
      %p49 = por %p47, %p48
      %s51 = sadd.s32 %s50, 1
      %p54 = scmp.eq.s32.totalorder %s16, 1
      %p55 = scmp.ne.s32.totalorder %s50, %s52
      %p56 = scmp.eq.s32.totalorder %s16, 0
      %p57 = por %p55, %p56
      %p58 = scmp.ne.s32.totalorder %s50, %s52
      %p59 = scmp.eq.s32.totalorder %s21, 1
      %p60 = por %p58, %p59
      %p61 = scmp.ne.s32.totalorder %s52, %s53
      %p62 = scmp.eq.s32.totalorder %s21, 0
      %p63 = por %p61, %p62
      %p64 = scmp.ne.s32.totalorder %s52, %s53
      %p65 = scmp.eq.s32.totalorder %s22, 1
      %p66 = por %p64, %p65
      %p68 = scmp.ne.s32.totalorder %s53, %s67
      %p69 = scmp.eq.s32.totalorder %s22, 0
      %p70 = por %p68, %p69
      %s72 = sadd.s32 %s71, 1
      %p75 = scmp.eq.s32.totalorder %s16, 1
      %p76 = scmp.ne.s32.totalorder %s71, %s73
      %p77 = scmp.eq.s32.totalorder %s16, 0
      %p78 = por %p76, %p77
      %p79 = scmp.ne.s32.totalorder %s71, %s73
      %p80 = scmp.eq.s32.totalorder %s21, 1
      %p81 = por %p79, %p80
      %p82 = scmp.ne.s32.totalorder %s73, %s74
      %p83 = scmp.eq.s32.totalorder %s21, 0
      %p84 = por %p82, %p83
      %p85 = scmp.ne.s32.totalorder %s73, %s74
      %p86 = scmp.eq.s32.totalorder %s22, 1
      %p87 = por %p85, %p86
      %p89 = scmp.ne.s32.totalorder %s74, %s88
      %p90 = scmp.eq.s32.totalorder %s22, 0
      %p91 = por %p89, %p90
      %s92 = ssub.s32 %s16, %s23
      %p93 = scmp.eq.s32.totalorder %s92, 0
      %s95 = sadd.s32 %s94, 1
      %s96 = scalar_select %p93, %s94, %s95
      %p99 = pneg %p93
      %p100 = scmp.eq.s32.totalorder %s16, 1
      %p101 = por %p99, %p100
      %p102 = scmp.ne.s32.totalorder %s94, %s97
      %p103 = scmp.eq.s32.totalorder %s16, 0
      %p104 = por %p102, %p103
      %p105 = scmp.ne.s32.totalorder %s94, %s97
      %p106 = scmp.eq.s32.totalorder %s21, 1
      %p107 = por %p105, %p106
      %p108 = scmp.ne.s32.totalorder %s97, %s98
      %p109 = scmp.eq.s32.totalorder %s21, 0
      %p110 = por %p108, %p109
      %p111 = scmp.ne.s32.totalorder %s97, %s98
      %p112 = scmp.eq.s32.totalorder %s22, 1
      %p113 = por %p111, %p112
      %p115 = scmp.ne.s32.totalorder %s98, %s114
      %p116 = scmp.eq.s32.totalorder %s22, 0
      %p117 = por %p115, %p116
      %p118 = scmp.le.s32.totalorder 1, %s16
      %p119 = scmp.lt.s32.totalorder %s16, 3
      %p120 = pnand %p118, %p119
      %p121 = pneg %p120
      // Predicated region
      $region9: #{tpu_custom_call.1} parent=5 // pred_check
        _
      $region10: #{tpu_custom_call.1} parent=5 // pred_check_branch
        %123 = sbr.rel (%p120) target = $region12
      $region11: #{tpu_custom_call.1} parent=5 // pred_region
        %s124 = ssub.s32 %s16, 1
        // Predicated region
        $region13: #{tpu_custom_call.1} parent=11 // pred_check
          %p125 = pneg %p63
        $region14: #{tpu_custom_call.1} parent=11 // pred_check_branch
          %127 = sbr.rel (%p125) target = $region16
        $region15: #{tpu_custom_call.1} parent=11 // pred_region
          %129 = vsyncadd [#allocation6], 0
          %s130 = sshll.u32 %s1, 4
          %s131 = int_to_ptr.hbm [resolvable:$true] %s130
          %s132 = sshll.u32 [#allocation5], 4
          %s133 = int_to_ptr.vmem [resolvable:$true] %s132
          %138 = dma.hbm_to_vmem [thread:$0]  %s131, 512, %s133, [#allocation6], 128, 128, 8
        $region16: #{tpu_custom_call.1} parent=11 // pred_fallthru
          _
        // Predicated region
        $region17: #{tpu_custom_call.1} parent=11 // pred_check
          %p139 = pneg %p84
        $region18: #{tpu_custom_call.1} parent=11 // pred_check_branch
          %141 = sbr.rel (%p139) target = $region20
        $region19: #{tpu_custom_call.1} parent=11 // pred_region
          _
        $region20: #{tpu_custom_call.1} parent=11 // pred_fallthru
          _
      $region12: #{tpu_custom_call.1} parent=5 // pred_fallthru
        _
      %p142 = scmp.lt.s32.totalorder %s16, 2
      // Predicated region
      $region21: #{tpu_custom_call.1} parent=5 // pred_check
        %p143 = pneg %p142
      $region22: #{tpu_custom_call.1} parent=5 // pred_check_branch
        %145 = sbr.rel (%p143) target = $region24
      $region23: #{tpu_custom_call.1} parent=5 // pred_region
        // Predicated region
        $region25: #{tpu_custom_call.1} parent=23 // pred_check
          %p146 = pneg %p36
        $region26: #{tpu_custom_call.1} parent=23 // pred_check_branch
          %148 = sbr.rel (%p146) target = $region28
        $region27: #{tpu_custom_call.1} parent=23 // pred_region
          %s149 = sand.u32 %s26, 1
          %s150 = scalar_lea.sflag [#allocation3], %s149
          %s151 = sand.u32 %s26, 1
          %s152 = smul.addr %s151, 8
          %s153 = scalar_lea.vmem [#allocation2], %s152
          %155 = vsyncadd %s150, 0
          %s156 = smul.addr %s16, 8
          %s157 = scalar_lea.hbm %s0, %s156
          %s159 = sshll.u32 %s157, 4
          %s160 = int_to_ptr.hbm [resolvable:$true] %s159
          %s161 = sshll.u32 %s153, 4
          %s162 = int_to_ptr.vmem [resolvable:$true] %s161
          %164 = dma.hbm_to_vmem [thread:$0]  %s160, 128, %s162, %s150
        $region28: #{tpu_custom_call.1} parent=23 // pred_fallthru
          _
      $region24: #{tpu_custom_call.1} parent=5 // pred_fallthru
        _
      %p165 = scmp.le.s32.totalorder 1, %s16
      %p166 = scmp.lt.s32.totalorder %s16, 3
      %p167 = pnand %p165, %p166
      %p168 = pneg %p167
      // Predicated region
      $region29: #{tpu_custom_call.1} parent=5 // pred_check
        _
      $region30: #{tpu_custom_call.1} parent=5 // pred_check_branch
        %170 = sbr.rel (%p167) target = $region32
      $region31: #{tpu_custom_call.1} parent=5 // pred_region
        %s171 = ssub.s32 %s16, 1
        %s172 = sand.u32 %s29, 1
        %s173 = scalar_lea.sflag [#allocation3], %s172
        %s174 = sand.u32 %s29, 1
        %s175 = smul.addr %s174, 8
        %s176 = scalar_lea.vmem [#allocation2], %s175
        // Predicated region
        $region33: #{tpu_custom_call.1} parent=31 // pred_check
          %p177 = pneg %p42
        $region34: #{tpu_custom_call.1} parent=31 // pred_check_branch
          %179 = sbr.rel (%p177) target = $region36
        $region35: #{tpu_custom_call.1} parent=31 // pred_region
          %181 = dma.done %s173, 128
        $region36: #{tpu_custom_call.1} parent=31 // pred_fallthru
          _
        // Predicated region
        $region37: #{tpu_custom_call.1} parent=31 // pred_check
          %p182 = pneg %p63
        $region38: #{tpu_custom_call.1} parent=31 // pred_check_branch
          %184 = sbr.rel (%p182) target = $region40
        $region39: #{tpu_custom_call.1} parent=31 // pred_region
          %186 = dma.done [#allocation6], 512
        $region40: #{tpu_custom_call.1} parent=31 // pred_fallthru
          _
        %s187 = sand.u32 %s29, 1
        %s188 = scalar_lea.sflag [#allocation3], %s187
        %s189 = sand.u32 %s29, 1
        %s190 = smul.addr %s189, 8
        %s191 = scalar_lea.vmem [#allocation2], %s190
        %p192 = pneg %p42
        %p193 = pneg %p39
        %p194 = pneg %p63
        %p195 = pneg %p60
        %p196 = pneg %p84
        %p197 = pneg %p81
        %p198 = pneg %p110
        %p199 = pneg %p107
        %s200 = sand.u32 %s97, 1
        %s201 = scalar_lea.sflag [#allocation4], %s200
        %s202 = sand.u32 %s97, 1
        %s203 = smul.addr %s202, 8
        %s204 = scalar_lea.vmem [#allocation7], %s203
        %v205 = vld [vmem:[%s176] sm:$0xff]
        %v206 = vld [vmem:[#allocation5] sm:$0xff]
        %v207 = vld [vmem:[#allocation5 + $0x8] sm:$0xff]
        %v208 = vld [vmem:[#allocation5 + $0x10] sm:$0xff]
        %v209 = vld [vmem:[#allocation5 + $0x18] sm:$0xff]
        %v210 = vld [vmem:[%s2] sm:$0x1]
        %v212 = vperm.slane %v210, 0
        %vm214 = vcmask 261120
        %v216 = vsel %vm214, %v205, 0
        %218 = vmatpush.msra.mxu0 0.0
        %219 = vmatpush.msra.mxu0 0.0
        %220 = vmatpush.msra.mxu0 0.0
        %221 = vmatpush.msra.mxu0 0.0
        %222 = vmatpush.msra.mxu0 0.0
        %223 = vmatpush.msra.mxu0 0.0
        %224 = vmatpush.msra.mxu0 0.0
        %225 = vmatpush.msra.mxu0 0.0
        %226 = vmatpush.msra.mxu0 0.0
        %227 = vmatpush.msra.mxu0 0.0
        %228 = vmatpush.msra.mxu0 0.0
        %229 = vmatpush.msra.mxu0 0.0
        %230 = vmatpush.msra.mxu0 %v209
        %231 = vmatpush.msra.mxu0 %v208
        %232 = vmatpush.msra.mxu0 %v207
        %233 = vmatpush.msra.mxu0 %v206
        %234 = vmatmul.f32.gmra.mxu0 %v216
        %v235 = vpop.f32.mrf.mxu0
        %v236 = vadd.f32 %v212, %v235
        %237 = vdwg.mxu0
        %239 = vrot.lane.b32.xlu0 %v236, 120
        %v240 = vpop.permute.xlu0 %239
        %241 = vrot.lane.b32.xlu0 %v236, 112
        %v242 = vpop.permute.xlu0 %241
        %243 = vrot.lane.b32.xlu0 %v236, 104
        %v244 = vpop.permute.xlu0 %243
        %245 = vrot.lane.b32.xlu0 %v236, 96
        %v246 = vpop.permute.xlu0 %245
        %vm247 = vcmask 64512
        %v248 = vsel %vm247, %v236, 0
        %v250 = vsel %vm247, %v246, 0
        %252 = vmatpush.xpose.msra.mxu0 0.0
        %253 = vmatpush.xpose.msra.mxu0 0.0
        %254 = vmatpush.xpose.msra.mxu0 0.0
        %255 = vmatpush.xpose.msra.mxu0 0.0
        %256 = vmatpush.xpose.msra.mxu0 0.0
        %257 = vmatpush.xpose.msra.mxu0 0.0
        %258 = vmatpush.xpose.msra.mxu0 0.0
        %259 = vmatpush.xpose.msra.mxu0 0.0
        %260 = vmatpush.xpose.msra.mxu0 0.0
        %261 = vmatpush.xpose.msra.mxu0 0.0
        %262 = vmatpush.xpose.msra.mxu0 0.0
        %263 = vmatpush.xpose.msra.mxu0 0.0
        %264 = vmatpush.xpose.msra.mxu0 0.0
        %265 = vmatpush.xpose.msra.mxu0 0.0
        %266 = vmatpush.xpose.msra.mxu0 0.0
        %267 = vmatpush.xpose.msra.mxu0 %v250
        %268 = vmatmul.f32.gmra.mxu0 %v248
        %v269 = vpop.f32.mrf.mxu0
        %v270 = vadd.f32 0.0, %v269
        %271 = vdwg.mxu0
        %272 = vrot.lane.b32.xlu0 %v240, 96
        %v273 = vpop.permute.xlu0 %272
        %v274 = vsel %vm247, %v240, 0
        %v276 = vsel %vm247, %v273, 0
        %278 = vmatpush.xpose.msra.mxu0 0.0
        %279 = vmatpush.xpose.msra.mxu0 0.0
        %280 = vmatpush.xpose.msra.mxu0 0.0
        %281 = vmatpush.xpose.msra.mxu0 0.0
        %282 = vmatpush.xpose.msra.mxu0 0.0
        %283 = vmatpush.xpose.msra.mxu0 0.0
        %284 = vmatpush.xpose.msra.mxu0 0.0
        %285 = vmatpush.xpose.msra.mxu0 0.0
        %286 = vmatpush.xpose.msra.mxu0 0.0
        %287 = vmatpush.xpose.msra.mxu0 0.0
        %288 = vmatpush.xpose.msra.mxu0 0.0
        %289 = vmatpush.xpose.msra.mxu0 0.0
        %290 = vmatpush.xpose.msra.mxu0 0.0
        %291 = vmatpush.xpose.msra.mxu0 0.0
        %292 = vmatpush.xpose.msra.mxu0 0.0
        %293 = vmatpush.xpose.msra.mxu0 %v276
        %294 = vmatmul.f32.gmra.mxu0 %v274
        %v295 = vpop.f32.mrf.mxu0
        %v296 = vadd.f32 0.0, %v295
        %297 = vdwg.mxu0
        %298 = vrot.lane.b32.xlu0 %v242, 96
        %v299 = vpop.permute.xlu0 %298
        %v300 = vsel %vm247, %v242, 0
        %v302 = vsel %vm247, %v299, 0
        %304 = vmatpush.xpose.msra.mxu0 0.0
        %305 = vmatpush.xpose.msra.mxu0 0.0
        %306 = vmatpush.xpose.msra.mxu0 0.0
        %307 = vmatpush.xpose.msra.mxu0 0.0
        %308 = vmatpush.xpose.msra.mxu0 0.0
        %309 = vmatpush.xpose.msra.mxu0 0.0
        %310 = vmatpush.xpose.msra.mxu0 0.0
        %311 = vmatpush.xpose.msra.mxu0 0.0
        %312 = vmatpush.xpose.msra.mxu0 0.0
        %313 = vmatpush.xpose.msra.mxu0 0.0
        %314 = vmatpush.xpose.msra.mxu0 0.0
        %315 = vmatpush.xpose.msra.mxu0 0.0
        %316 = vmatpush.xpose.msra.mxu0 0.0
        %317 = vmatpush.xpose.msra.mxu0 0.0
        %318 = vmatpush.xpose.msra.mxu0 0.0
        %319 = vmatpush.xpose.msra.mxu0 %v302
        %320 = vmatmul.f32.gmra.mxu0 %v300
        %v321 = vpop.f32.mrf.mxu0
        %v322 = vadd.f32 0.0, %v321
        %323 = vdwg.mxu0
        %324 = vrot.lane.b32.xlu0 %v244, 96
        %v325 = vpop.permute.xlu0 %324
        %v326 = vsel %vm247, %v244, 0
        %v328 = vsel %vm247, %v325, 0
        %330 = vmatpush.xpose.msra.mxu0 0.0
        %331 = vmatpush.xpose.msra.mxu0 0.0
        %332 = vmatpush.xpose.msra.mxu0 0.0
        %333 = vmatpush.xpose.msra.mxu0 0.0
        %334 = vmatpush.xpose.msra.mxu0 0.0
        %335 = vmatpush.xpose.msra.mxu0 0.0
        %336 = vmatpush.xpose.msra.mxu0 0.0
        %337 = vmatpush.xpose.msra.mxu0 0.0
        %338 = vmatpush.xpose.msra.mxu0 0.0
        %339 = vmatpush.xpose.msra.mxu0 0.0
        %340 = vmatpush.xpose.msra.mxu0 0.0
        %341 = vmatpush.xpose.msra.mxu0 0.0
        %342 = vmatpush.xpose.msra.mxu0 0.0
        %343 = vmatpush.xpose.msra.mxu0 0.0
        %344 = vmatpush.xpose.msra.mxu0 0.0
        %345 = vmatpush.xpose.msra.mxu0 %v328
        %346 = vmatmul.f32.gmra.mxu0 %v326
        %v347 = vpop.f32.mrf.mxu0
        %v348 = vadd.f32 0.0, %v347
        %349 = vdwg.mxu0
        %v350 = vsel %vm247, %v270, -inf
        %351 = vmax.xlane.f32.xlu0 %v350
        %v352 = vpop.xlane.xlu0 %351
        %v353 = vsel %vm247, %v296, -inf
        %354 = vmax.xlane.f32.xlu0 %v353
        %v355 = vpop.xlane.xlu0 %354
        %v356 = vsel %vm247, %v322, -inf
        %357 = vmax.xlane.f32.xlu0 %v356
        %v358 = vpop.xlane.xlu0 %357
        %v359 = vsel %vm247, %v348, -inf
        %360 = vmax.xlane.f32.xlu0 %v359
        %v361 = vpop.xlane.xlu0 %360
        %v362 = vsub.f32 %v270, %v352
        %v363 = vsub.f32 %v296, %v355
        %v364 = vsub.f32 %v322, %v358
        %v365 = vsub.f32 %v348, %v361
        %v366 = vmul.f32 %v362, 1.442695
        %v367 = vpow.pop %v366
        %v368 = vmul.f32 %v363, 1.442695
        %v369 = vpow.pop %v368
        %v370 = vmul.f32 %v364, 1.442695
        %v371 = vpow.pop %v370
        %v372 = vmul.f32 %v365, 1.442695
        %v373 = vpow.pop %v372
        %v374 = vsel %vm247, %v367, 0.0
        %375 = vadd.xlane.f32.xlu0 %v374
        %v376 = vpop.xlane.xlu0 %375
        %v377 = vsel %vm247, %v369, 0.0
        %378 = vadd.xlane.f32.xlu0 %v377
        %v379 = vpop.xlane.xlu0 %378
        %v380 = vsel %vm247, %v371, 0.0
        %381 = vadd.xlane.f32.xlu0 %v380
        %v382 = vpop.xlane.xlu0 %381
        %v383 = vsel %vm247, %v373, 0.0
        %384 = vadd.xlane.f32.xlu0 %v383
        %v385 = vpop.xlane.xlu0 %384
        %v386 = vrcp.pop %v376
        %v387 = vrcp.pop %v379
        %v388 = vrcp.pop %v382
        %v389 = vrcp.pop %v385
        %v390 = vmul.f32 %v367, %v386
        %v391 = vmul.f32 %v369, %v387
        %v392 = vmul.f32 %v371, %v388
        %v393 = vmul.f32 %v373, %v389
        %394 = vrot.lane.b32.xlu0 %v236, 64
        %v395 = vpop.permute.xlu0 %394
        %v398 = vsel %vm247, %v390, 0
        %400 = vmatpush.msra.mxu0 0.0
        %401 = vmatpush.msra.mxu0 0.0
        %402 = vmatpush.msra.mxu0 0.0
        %403 = vmatpush.msra.mxu0 0.0
        %404 = vmatpush.msra.mxu0 0.0
        %405 = vmatpush.msra.mxu0 0.0
        %406 = vmatpush.msra.mxu0 0.0
        %407 = vmatpush.msra.mxu0 0.0
        %408 = vmatpush.msra.mxu0 0.0
        %409 = vmatpush.msra.mxu0 0.0
        %410 = vmatpush.msra.mxu0 0.0
        %411 = vmatpush.msra.mxu0 0.0
        %412 = vmatpush.msra.mxu0 0.0
        %413 = vmatpush.msra.mxu0 0.0
        %414 = vmatpush.msra.mxu0 0.0
        %415 = vmatpush.msra.mxu0 %v395
        %416 = vmatmul.f32.gmra.mxu0 %v398
        %v417 = vpop.f32.mrf.mxu0
        %v418 = vadd.f32 0.0, %v417
        %419 = vdwg.mxu0
        %420 = vrot.lane.b32.xlu0 %v240, 64
        %v421 = vpop.permute.xlu0 %420
        %v424 = vsel %vm247, %v391, 0
        %426 = vmatpush.msra.mxu0 0.0
        %427 = vmatpush.msra.mxu0 0.0
        %428 = vmatpush.msra.mxu0 0.0
        %429 = vmatpush.msra.mxu0 0.0
        %430 = vmatpush.msra.mxu0 0.0
        %431 = vmatpush.msra.mxu0 0.0
        %432 = vmatpush.msra.mxu0 0.0
        %433 = vmatpush.msra.mxu0 0.0
        %434 = vmatpush.msra.mxu0 0.0
        %435 = vmatpush.msra.mxu0 0.0
        %436 = vmatpush.msra.mxu0 0.0
        %437 = vmatpush.msra.mxu0 0.0
        %438 = vmatpush.msra.mxu0 0.0
        %439 = vmatpush.msra.mxu0 0.0
        %440 = vmatpush.msra.mxu0 0.0
        %441 = vmatpush.msra.mxu0 %v421
        %442 = vmatmul.f32.gmra.mxu0 %v424
        %v443 = vpop.f32.mrf.mxu0
        %v444 = vadd.f32 0.0, %v443
        %445 = vdwg.mxu0
        %446 = vrot.lane.b32.xlu0 %v242, 64
        %v447 = vpop.permute.xlu0 %446
        %v450 = vsel %vm247, %v392, 0
        %452 = vmatpush.msra.mxu0 0.0
        %453 = vmatpush.msra.mxu0 0.0
        %454 = vmatpush.msra.mxu0 0.0
        %455 = vmatpush.msra.mxu0 0.0
        %456 = vmatpush.msra.mxu0 0.0
        %457 = vmatpush.msra.mxu0 0.0
        %458 = vmatpush.msra.mxu0 0.0
        %459 = vmatpush.msra.mxu0 0.0
        %460 = vmatpush.msra.mxu0 0.0
        %461 = vmatpush.msra.mxu0 0.0
        %462 = vmatpush.msra.mxu0 0.0
        %463 = vmatpush.msra.mxu0 0.0
        %464 = vmatpush.msra.mxu0 0.0
        %465 = vmatpush.msra.mxu0 0.0
        %466 = vmatpush.msra.mxu0 0.0
        %467 = vmatpush.msra.mxu0 %v447
        %468 = vmatmul.f32.gmra.mxu0 %v450
        %v469 = vpop.f32.mrf.mxu0
        %v470 = vadd.f32 0.0, %v469
        %471 = vdwg.mxu0
        %472 = vrot.lane.b32.xlu0 %v244, 64
        %v473 = vpop.permute.xlu0 %472
        %v476 = vsel %vm247, %v393, 0
        %478 = vmatpush.msra.mxu0 0.0
        %479 = vmatpush.msra.mxu0 0.0
        %480 = vmatpush.msra.mxu0 0.0
        %481 = vmatpush.msra.mxu0 0.0
        %482 = vmatpush.msra.mxu0 0.0
        %483 = vmatpush.msra.mxu0 0.0
        %484 = vmatpush.msra.mxu0 0.0
        %485 = vmatpush.msra.mxu0 0.0
        %486 = vmatpush.msra.mxu0 0.0
        %487 = vmatpush.msra.mxu0 0.0
        %488 = vmatpush.msra.mxu0 0.0
        %489 = vmatpush.msra.mxu0 0.0
        %490 = vmatpush.msra.mxu0 0.0
        %491 = vmatpush.msra.mxu0 0.0
        %492 = vmatpush.msra.mxu0 0.0
        %493 = vmatpush.msra.mxu0 %v473
        %494 = vmatmul.f32.gmra.mxu0 %v476
        %v495 = vpop.f32.mrf.mxu0
        %v496 = vadd.f32 0.0, %v495
        %497 = vdwg.mxu0
        %499 = vrot.lane.b32.xlu0 %v444, 8
        %v500 = vpop.permute.xlu0 %499
        %503 = vrot.lane.b32.xlu0 %v470, 16
        %v504 = vpop.permute.xlu0 %503
        %507 = vrot.lane.b32.xlu0 %v496, 24
        %v508 = vpop.permute.xlu0 %507
        %v510 = vsel %vm247, %v418, %v500
        %vm511 = vcmask 130048
        %v512 = vsel %vm511, %v510, %v504
        %vm513 = vcmask 195584
        %v514 = vsel %vm513, %v512, %v508
        %515 = vst.msk [vmem:[%s204] sm:$0xff] %vm214, %v514
        %s516 = sand.u32 %s97, 1
        %s517 = scalar_lea.sflag [#allocation4], %s516
        %s518 = sand.u32 %s97, 1
        %s519 = smul.addr %s518, 8
        %s520 = scalar_lea.vmem [#allocation7], %s519
        // Predicated region
        $region41: #{tpu_custom_call.1} parent=31 // pred_check
          %p521 = pneg %p107
        $region42: #{tpu_custom_call.1} parent=31 // pred_check_branch
          %523 = sbr.rel (%p521) target = $region44
        $region43: #{tpu_custom_call.1} parent=31 // pred_region
          %525 = vsyncadd %s517, 0
          %s526 = smul.addr %s21, 8
          %s527 = scalar_lea.hbm %s3, %s526
          %s529 = sshll.u32 %s520, 4
          %s530 = int_to_ptr.vmem [resolvable:$true] %s529
          %s531 = sshll.u32 %s527, 4
          %s532 = int_to_ptr.hbm [resolvable:$true] %s531
          %534 = dma.vmem_to_hbm [thread:$0]  %s530, 128, %s532, %s517
        $region44: #{tpu_custom_call.1} parent=31 // pred_fallthru
          _
      $region32: #{tpu_custom_call.1} parent=5 // pred_fallthru
        _
      %p535 = scmp.le.s32.totalorder 2, %s16
      // Predicated region
      $region45: #{tpu_custom_call.1} parent=5 // pred_check
        %p536 = pneg %p535
      $region46: #{tpu_custom_call.1} parent=5 // pred_check_branch
        %538 = sbr.rel (%p536) target = $region48
      $region47: #{tpu_custom_call.1} parent=5 // pred_region
        %s539 = ssub.s32 %s16, 2
        // Predicated region
        $region49: #{tpu_custom_call.1} parent=47 // pred_check
          %p540 = pneg %p113
        $region50: #{tpu_custom_call.1} parent=47 // pred_check_branch
          %542 = sbr.rel (%p540) target = $region52
        $region51: #{tpu_custom_call.1} parent=47 // pred_region
          %s543 = sand.u32 %s98, 1
          %s544 = scalar_lea.sflag [#allocation4], %s543
          %s545 = sand.u32 %s98, 1
          %s546 = smul.addr %s545, 8
          %s547 = scalar_lea.vmem [#allocation7], %s546
          %549 = dma.done %s544, 128
        $region52: #{tpu_custom_call.1} parent=47 // pred_fallthru
          _
      $region48: #{tpu_custom_call.1} parent=5 // pred_fallthru
        _
    $region6: #{tpu_custom_call.1} parent=1 // loop_footer
      %s20 = sadd.s32 1, %s16
    $region7: #{tpu_custom_call.1} parent=1 // loop_footer_branch
      %15 = sbr.rel target = $region3
    $region8: #{tpu_custom_call.1} parent=1 // loop_exit
      _
    %550 = vsyncpa [#allocation3], 1
    %s551 = scalar_lea.sflag [#allocation3], 1
    %552 = vsyncpa %s551, 1
    %553 = vsyncpa [#allocation6], 1
    %554 = vsyncpa [#allocation4], 1
    %s555 = scalar_lea.sflag [#allocation4], 1
    %556 = vsyncpa %s555, 1

// kernel: tpu_custom_call.1
$region0: #{tpu_custom_call.1}
  #allocation0 [shape = 'u32[]', space=smem, size = 0x4, offset = 0x4, fixed_abs, tag = 'smem constant byte address 0x4 - core index']
  #allocation1 [shape = 'u32[72,128]{1,0:T(1,128)}', space=vmem, size = 0x9000, scoped, tag = 'internal scratch']
  %s0 = inlined_call_operand.hbm [shape: f32[2,8,32], index: 0, kind: input, shape index: {}]
  %s1 = inlined_call_operand.hbm [shape: f32[32,96], index: 1, kind: input, shape index: {}]
  %s2 = inlined_call_operand.vmem [shape: f32[1,96], index: 2, kind: input, shape index: {}]
  %s3 = inlined_call_operand.hbm [shape: f32[2,8,32], index: 3, kind: output, shape index: {}]
  %s4 = sld [smem:[#allocation0]]
  $region53: #{tpu_custom_call.1} parent=0
    _
  %s6 = ssub.s32 1, %s4
  %s7 = scalar_select 0, %s6, %s4
  $region1: #{tpu_custom_call.1} parent=0
    #allocation2 [shape = 'u8[8192]{0}', space=vmem, size = 0x2000, scoped, tag = 'input window, operand 0']
    #allocation3 [shape = 's32[2]{0}', space=sflag, size = 0x8, scoped, tag = 'scoped memory for tpu_custom_call.1']
    #allocation4 [shape = 's32[2]{0}', space=sflag, size = 0x8, scoped, tag = 'scoped memory for tpu_custom_call.1']
    #allocation5 [shape = 'u8[16384]{0}', space=vmem, size = 0x4000, scoped, tag = 'input window, operand 1, single buffered']
    #allocation6 [shape = 's32[1]{0}', space=sflag, size = 0x4, scoped, tag = 'scoped memory for tpu_custom_call.1']
    #allocation7 [shape = 'u8[8192]{0}', space=vmem, size = 0x2000, scoped, tag = 'output window, operand 0']
    %8 = vsyncpa [#allocation3], 0
    %s9 = scalar_lea.sflag [#allocation3], 1
    %10 = vsyncpa %s9, 0
    %11 = vsyncpa [#allocation6], 0
    %12 = vsyncpa [#allocation4], 0
    %s13 = scalar_lea.sflag [#allocation4], 1
    %14 = vsyncpa %s13, 0
    loop: start=0, step=1, limit=4
    $region2: #{tpu_custom_call.1} parent=1 // loop_pre_header
      _
    $region3: #{tpu_custom_call.1} parent=1 // loop_header
      %s16 = sphi 0, %s20
      %p17 = scmp.ge.s32.totalorder %s16, 4
      %s26 = sphi 0, %s28
      %s29 = sphi 0, %s26
      %s30 = sphi 0, %s29
      %s46 = sphi 0, %s30
      %s50 = sphi 0, %s50
      %s52 = sphi 0, %s50
      %s53 = sphi 0, %s52
      %s67 = sphi 0, %s53
      %s71 = sphi 0, %s71
      %s73 = sphi 0, %s71
      %s74 = sphi 0, %s73
      %s88 = sphi 0, %s74
      %s94 = sphi 0, %s96
      %s97 = sphi 0, %s94
      %s98 = sphi 0, %s97
      %s114 = sphi 0, %s98
    $region4: #{tpu_custom_call.1} parent=1 // loop_header_branch
      %19 = sbr.rel (%p17) target = $region8
    $region5: #{tpu_custom_call.1} parent=1 // loop_body
      %s21 = ssub.s32 %s16, 1
      %s22 = ssub.s32 %s16, 2
      %s23 = sadd.s32 %s16, 1
      %s24 = ssub.s32 %s16, %s23
      %p25 = scmp.eq.s32.totalorder %s24, 0
      %s27 = sadd.s32 %s26, 1
      %s28 = scalar_select %p25, %s26, %s27
      %p31 = pneg %p25
      %p32 = scmp.eq.s32.totalorder %s16, 1
      %p33 = por %p31, %p32
      %p34 = scmp.ne.s32.totalorder %s26, %s29
      %p35 = scmp.eq.s32.totalorder %s16, 0
      %p36 = por %p34, %p35
      %p37 = scmp.ne.s32.totalorder %s26, %s29
      %p38 = scmp.eq.s32.totalorder %s21, 1
      %p39 = por %p37, %p38
      %p40 = scmp.ne.s32.totalorder %s29, %s30
      %p41 = scmp.eq.s32.totalorder %s21, 0
      %p42 = por %p40, %p41
      %p43 = scmp.ne.s32.totalorder %s29, %s30
      %p44 = scmp.eq.s32.totalorder %s22, 1
      %p45 = por %p43, %p44
      %p47 = scmp.ne.s32.totalorder %s30, %s46
      %p48 = scmp.eq.s32.totalorder %s22, 0
      %p49 = por %p47, %p48
      %s51 = sadd.s32 %s50, 1
      %p54 = scmp.eq.s32.totalorder %s16, 1
      %p55 = scmp.ne.s32.totalorder %s50, %s52
      %p56 = scmp.eq.s32.totalorder %s16, 0
      %p57 = por %p55, %p56
      %p58 = scmp.ne.s32.totalorder %s50, %s52
      %p59 = scmp.eq.s32.totalorder %s21, 1
      %p60 = por %p58, %p59
      %p61 = scmp.ne.s32.totalorder %s52, %s53
      %p62 = scmp.eq.s32.totalorder %s21, 0
      %p63 = por %p61, %p62
      %p64 = scmp.ne.s32.totalorder %s52, %s53
      %p65 = scmp.eq.s32.totalorder %s22, 1
      %p66 = por %p64, %p65
      %p68 = scmp.ne.s32.totalorder %s53, %s67
      %p69 = scmp.eq.s32.totalorder %s22, 0
      %p70 = por %p68, %p69
      %s72 = sadd.s32 %s71, 1
      %p75 = scmp.eq.s32.totalorder %s16, 1
      %p76 = scmp.ne.s32.totalorder %s71, %s73
      %p77 = scmp.eq.s32.totalorder %s16, 0
      %p78 = por %p76, %p77
      %p79 = scmp.ne.s32.totalorder %s71, %s73
      %p80 = scmp.eq.s32.totalorder %s21, 1
      %p81 = por %p79, %p80
      %p82 = scmp.ne.s32.totalorder %s73, %s74
      %p83 = scmp.eq.s32.totalorder %s21, 0
      %p84 = por %p82, %p83
      %p85 = scmp.ne.s32.totalorder %s73, %s74
      %p86 = scmp.eq.s32.totalorder %s22, 1
      %p87 = por %p85, %p86
      %p89 = scmp.ne.s32.totalorder %s74, %s88
      %p90 = scmp.eq.s32.totalorder %s22, 0
      %p91 = por %p89, %p90
      %s92 = ssub.s32 %s16, %s23
      %p93 = scmp.eq.s32.totalorder %s92, 0
      %s95 = sadd.s32 %s94, 1
      %s96 = scalar_select %p93, %s94, %s95
      %p99 = pneg %p93
      %p100 = scmp.eq.s32.totalorder %s16, 1
      %p101 = por %p99, %p100
      %p102 = scmp.ne.s32.totalorder %s94, %s97
      %p103 = scmp.eq.s32.totalorder %s16, 0
      %p104 = por %p102, %p103
      %p105 = scmp.ne.s32.totalorder %s94, %s97
      %p106 = scmp.eq.s32.totalorder %s21, 1
      %p107 = por %p105, %p106
      %p108 = scmp.ne.s32.totalorder %s97, %s98
      %p109 = scmp.eq.s32.totalorder %s21, 0
      %p110 = por %p108, %p109
      %p111 = scmp.ne.s32.totalorder %s97, %s98
      %p112 = scmp.eq.s32.totalorder %s22, 1
      %p113 = por %p111, %p112
      %p115 = scmp.ne.s32.totalorder %s98, %s114
      %p116 = scmp.eq.s32.totalorder %s22, 0
      %p117 = por %p115, %p116
      %p118 = scmp.le.s32.totalorder 1, %s16
      %p119 = scmp.lt.s32.totalorder %s16, 3
      %p120 = pnand %p118, %p119
      %p121 = pneg %p120
      // Predicated region
      $region9: #{tpu_custom_call.1} parent=5 // pred_check
        _
      $region10: #{tpu_custom_call.1} parent=5 // pred_check_branch
        %123 = sbr.rel (%p120) target = $region12
      $region11: #{tpu_custom_call.1} parent=5 // pred_region
        %s124 = ssub.s32 %s16, 1
        // Predicated region
        $region13: #{tpu_custom_call.1} parent=11 // pred_check
          %p125 = pneg %p63
        $region14: #{tpu_custom_call.1} parent=11 // pred_check_branch
          %127 = sbr.rel (%p125) target = $region16
        $region15: #{tpu_custom_call.1} parent=11 // pred_region
          %129 = vsyncadd [#allocation6], 0
          %s130 = sshll.u32 %s1, 4
          %s131 = int_to_ptr.hbm [resolvable:$true] %s130
          %s132 = sshll.u32 [#allocation5], 4
          %s133 = int_to_ptr.vmem [resolvable:$true] %s132
          %138 = dma.hbm_to_vmem [thread:$0]  %s131, 512, %s133, [#allocation6], 128, 128, 8
        $region16: #{tpu_custom_call.1} parent=11 // pred_fallthru
          _
        // Predicated region
        $region17: #{tpu_custom_call.1} parent=11 // pred_check
          %p139 = pneg %p84
        $region18: #{tpu_custom_call.1} parent=11 // pred_check_branch
          %141 = sbr.rel (%p139) target = $region20
        $region19: #{tpu_custom_call.1} parent=11 // pred_region
          _
        $region20: #{tpu_custom_call.1} parent=11 // pred_fallthru
          _
      $region12: #{tpu_custom_call.1} parent=5 // pred_fallthru
        _
      %p142 = scmp.lt.s32.totalorder %s16, 2
      // Predicated region
      $region21: #{tpu_custom_call.1} parent=5 // pred_check
        %p143 = pneg %p142
      $region22: #{tpu_custom_call.1} parent=5 // pred_check_branch
        %145 = sbr.rel (%p143) target = $region24
      $region23: #{tpu_custom_call.1} parent=5 // pred_region
        // Predicated region
        $region25: #{tpu_custom_call.1} parent=23 // pred_check
          %p146 = pneg %p36
        $region26: #{tpu_custom_call.1} parent=23 // pred_check_branch
          %148 = sbr.rel (%p146) target = $region28
        $region27: #{tpu_custom_call.1} parent=23 // pred_region
          %s149 = sand.u32 %s26, 1
          %s150 = scalar_lea.sflag [#allocation3], %s149
          %s151 = sand.u32 %s26, 1
          %s152 = smul.addr %s151, 8
          %s153 = scalar_lea.vmem [#allocation2], %s152
          %155 = vsyncadd %s150, 0
          %s156 = smul.addr %s16, 8
          %s157 = scalar_lea.hbm %s0, %s156
          %s159 = sshll.u32 %s157, 4
          %s160 = int_to_ptr.hbm [resolvable:$true] %s159
          %s161 = sshll.u32 %s153, 4
          %s162 = int_to_ptr.vmem [resolvable:$true] %s161
          %164 = dma.hbm_to_vmem [thread:$0]  %s160, 128, %s162, %s150
        $region28: #{tpu_custom_call.1} parent=23 // pred_fallthru
          _
      $region24: #{tpu_custom_call.1} parent=5 // pred_fallthru
        _
      %p165 = scmp.le.s32.totalorder 1, %s16
      %p166 = scmp.lt.s32.totalorder %s16, 3
      %p167 = pnand %p165, %p166
      %p168 = pneg %p167
      // Predicated region
      $region29: #{tpu_custom_call.1} parent=5 // pred_check
        _
      $region30: #{tpu_custom_call.1} parent=5 // pred_check_branch
        %170 = sbr.rel (%p167) target = $region32
      $region31: #{tpu_custom_call.1} parent=5 // pred_region
        %s171 = ssub.s32 %s16, 1
        %s172 = sand.u32 %s29, 1
        %s173 = scalar_lea.sflag [#allocation3], %s172
        %s174 = sand.u32 %s29, 1
        %s175 = smul.addr %s174, 8
        %s176 = scalar_lea.vmem [#allocation2], %s175
        // Predicated region
        $region33: #{tpu_custom_call.1} parent=31 // pred_check
          %p177 = pneg %p42
        $region34: #{tpu_custom_call.1} parent=31 // pred_check_branch
          %179 = sbr.rel (%p177) target = $region36
        $region35: #{tpu_custom_call.1} parent=31 // pred_region
          %181 = dma.done %s173, 128
        $region36: #{tpu_custom_call.1} parent=31 // pred_fallthru
          _
        // Predicated region
        $region37: #{tpu_custom_call.1} parent=31 // pred_check
          %p182 = pneg %p63
        $region38: #{tpu_custom_call.1} parent=31 // pred_check_branch
          %184 = sbr.rel (%p182) target = $region40
        $region39: #{tpu_custom_call.1} parent=31 // pred_region
          %186 = dma.done [#allocation6], 512
        $region40: #{tpu_custom_call.1} parent=31 // pred_fallthru
          _
        %s187 = sand.u32 %s29, 1
        %s188 = scalar_lea.sflag [#allocation3], %s187
        %s189 = sand.u32 %s29, 1
        %s190 = smul.addr %s189, 8
        %s191 = scalar_lea.vmem [#allocation2], %s190
        %p192 = pneg %p42
        %p193 = pneg %p39
        %p194 = pneg %p63
        %p195 = pneg %p60
        %p196 = pneg %p84
        %p197 = pneg %p81
        %p198 = pneg %p110
        %p199 = pneg %p107
        %s200 = sand.u32 %s97, 1
        %s201 = scalar_lea.sflag [#allocation4], %s200
        %s202 = sand.u32 %s97, 1
        %s203 = smul.addr %s202, 8
        %s204 = scalar_lea.vmem [#allocation7], %s203
        %v205 = vld [vmem:[%s176] sm:$0xff]
        %v206 = vld [vmem:[#allocation5] sm:$0xff]
        %v207 = vld [vmem:[#allocation5 + $0x8] sm:$0xff]
        %v208 = vld [vmem:[#allocation5 + $0x10] sm:$0xff]
        %v209 = vld [vmem:[#allocation5 + $0x18] sm:$0xff]
        %v210 = vld [vmem:[%s2] sm:$0x1]
        %v212 = vperm.slane %v210, 0
        %vm214 = vcmask 261120
        %v216 = vsel %vm214, %v205, 0
        %218 = vmatpush.msra.mxu0 0.0
        %219 = vmatpush.msra.mxu0 0.0
        %220 = vmatpush.msra.mxu0 0.0
        %221 = vmatpush.msra.mxu0 0.0
        %222 = vmatpush.msra.mxu0 0.0
        %223 = vmatpush.msra.mxu0 0.0
        %224 = vmatpush.msra.mxu0 0.0
        %225 = vmatpush.msra.mxu0 0.0
        %226 = vmatpush.msra.mxu0 0.0
        %227 = vmatpush.msra.mxu0 0.0
        %228 = vmatpush.msra.mxu0 0.0
        %229 = vmatpush.msra.mxu0 0.0
        %230 = vmatpush.msra.mxu0 %v209
        %231 = vmatpush.msra.mxu0 %v208
        %232 = vmatpush.msra.mxu0 %v207
        %233 = vmatpush.msra.mxu0 %v206
        %234 = vmatmul.f32.gmra.mxu0 %v216
        %v235 = vpop.f32.mrf.mxu0
        %v236 = vadd.f32 %v212, %v235
        %237 = vdwg.mxu0
        %239 = vrot.lane.b32.xlu0 %v236, 120
        %v240 = vpop.permute.xlu0 %239
        %241 = vrot.lane.b32.xlu0 %v236, 112
        %v242 = vpop.permute.xlu0 %241
        %243 = vrot.lane.b32.xlu0 %v236, 104
        %v244 = vpop.permute.xlu0 %243
        %245 = vrot.lane.b32.xlu0 %v236, 96
        %v246 = vpop.permute.xlu0 %245
        %vm247 = vcmask 64512
        %v248 = vsel %vm247, %v236, 0
        %v250 = vsel %vm247, %v246, 0
        %252 = vmatpush.xpose.msra.mxu0 0.0
        %253 = vmatpush.xpose.msra.mxu0 0.0
        %254 = vmatpush.xpose.msra.mxu0 0.0
        %255 = vmatpush.xpose.msra.mxu0 0.0
        %256 = vmatpush.xpose.msra.mxu0 0.0
        %257 = vmatpush.xpose.msra.mxu0 0.0
        %258 = vmatpush.xpose.msra.mxu0 0.0
        %259 = vmatpush.xpose.msra.mxu0 0.0
        %260 = vmatpush.xpose.msra.mxu0 0.0
        %261 = vmatpush.xpose.msra.mxu0 0.0
        %262 = vmatpush.xpose.msra.mxu0 0.0
        %263 = vmatpush.xpose.msra.mxu0 0.0
        %264 = vmatpush.xpose.msra.mxu0 0.0
        %265 = vmatpush.xpose.msra.mxu0 0.0
        %266 = vmatpush.xpose.msra.mxu0 0.0
        %267 = vmatpush.xpose.msra.mxu0 %v250
        %268 = vmatmul.f32.gmra.mxu0 %v248
        %v269 = vpop.f32.mrf.mxu0
        %v270 = vadd.f32 0.0, %v269
        %271 = vdwg.mxu0
        %272 = vrot.lane.b32.xlu0 %v240, 96
        %v273 = vpop.permute.xlu0 %272
        %v274 = vsel %vm247, %v240, 0
        %v276 = vsel %vm247, %v273, 0
        %278 = vmatpush.xpose.msra.mxu0 0.0
        %279 = vmatpush.xpose.msra.mxu0 0.0
        %280 = vmatpush.xpose.msra.mxu0 0.0
        %281 = vmatpush.xpose.msra.mxu0 0.0
        %282 = vmatpush.xpose.msra.mxu0 0.0
        %283 = vmatpush.xpose.msra.mxu0 0.0
        %284 = vmatpush.xpose.msra.mxu0 0.0
        %285 = vmatpush.xpose.msra.mxu0 0.0
        %286 = vmatpush.xpose.msra.mxu0 0.0
        %287 = vmatpush.xpose.msra.mxu0 0.0
        %288 = vmatpush.xpose.msra.mxu0 0.0
        %289 = vmatpush.xpose.msra.mxu0 0.0
        %290 = vmatpush.xpose.msra.mxu0 0.0
        %291 = vmatpush.xpose.msra.mxu0 0.0
        %292 = vmatpush.xpose.msra.mxu0 0.0
        %293 = vmatpush.xpose.msra.mxu0 %v276
        %294 = vmatmul.f32.gmra.mxu0 %v274
        %v295 = vpop.f32.mrf.mxu0
        %v296 = vadd.f32 0.0, %v295
        %297 = vdwg.mxu0
        %298 = vrot.lane.b32.xlu0 %v242, 96
        %v299 = vpop.permute.xlu0 %298
        %v300 = vsel %vm247, %v242, 0
        %v302 = vsel %vm247, %v299, 0
        %304 = vmatpush.xpose.msra.mxu0 0.0
        %305 = vmatpush.xpose.msra.mxu0 0.0
        %306 = vmatpush.xpose.msra.mxu0 0.0
        %307 = vmatpush.xpose.msra.mxu0 0.0
        %308 = vmatpush.xpose.msra.mxu0 0.0
        %309 = vmatpush.xpose.msra.mxu0 0.0
        %310 = vmatpush.xpose.msra.mxu0 0.0
        %311 = vmatpush.xpose.msra.mxu0 0.0
        %312 = vmatpush.xpose.msra.mxu0 0.0
        %313 = vmatpush.xpose.msra.mxu0 0.0
        %314 = vmatpush.xpose.msra.mxu0 0.0
        %315 = vmatpush.xpose.msra.mxu0 0.0
        %316 = vmatpush.xpose.msra.mxu0 0.0
        %317 = vmatpush.xpose.msra.mxu0 0.0
        %318 = vmatpush.xpose.msra.mxu0 0.0
        %319 = vmatpush.xpose.msra.mxu0 %v302
        %320 = vmatmul.f32.gmra.mxu0 %v300
        %v321 = vpop.f32.mrf.mxu0
        %v322 = vadd.f32 0.0, %v321
        %323 = vdwg.mxu0
        %324 = vrot.lane.b32.xlu0 %v244, 96
        %v325 = vpop.permute.xlu0 %324
        %v326 = vsel %vm247, %v244, 0
        %v328 = vsel %vm247, %v325, 0
        %330 = vmatpush.xpose.msra.mxu0 0.0
        %331 = vmatpush.xpose.msra.mxu0 0.0
        %332 = vmatpush.xpose.msra.mxu0 0.0
        %333 = vmatpush.xpose.msra.mxu0 0.0
        %334 = vmatpush.xpose.msra.mxu0 0.0
        %335 = vmatpush.xpose.msra.mxu0 0.0
        %336 = vmatpush.xpose.msra.mxu0 0.0
        %337 = vmatpush.xpose.msra.mxu0 0.0
        %338 = vmatpush.xpose.msra.mxu0 0.0
        %339 = vmatpush.xpose.msra.mxu0 0.0
        %340 = vmatpush.xpose.msra.mxu0 0.0
        %341 = vmatpush.xpose.msra.mxu0 0.0
        %342 = vmatpush.xpose.msra.mxu0 0.0
        %343 = vmatpush.xpose.msra.mxu0 0.0
        %344 = vmatpush.xpose.msra.mxu0 0.0
        %345 = vmatpush.xpose.msra.mxu0 %v328
        %346 = vmatmul.f32.gmra.mxu0 %v326
        %v347 = vpop.f32.mrf.mxu0
        %v348 = vadd.f32 0.0, %v347
        %349 = vdwg.mxu0
        %v350 = vsel %vm247, %v270, -inf
        %351 = vmax.xlane.f32.xlu0 %v350
        %v352 = vpop.xlane.xlu0 %351
        %v353 = vsel %vm247, %v296, -inf
        %354 = vmax.xlane.f32.xlu0 %v353
        %v355 = vpop.xlane.xlu0 %354
        %v356 = vsel %vm247, %v322, -inf
        %357 = vmax.xlane.f32.xlu0 %v356
        %v358 = vpop.xlane.xlu0 %357
        %v359 = vsel %vm247, %v348, -inf
        %360 = vmax.xlane.f32.xlu0 %v359
        %v361 = vpop.xlane.xlu0 %360
        %v362 = vsub.f32 %v270, %v352
        %v363 = vsub.f32 %v296, %v355
        %v364 = vsub.f32 %v322, %v358
        %v365 = vsub.f32 %v348, %v361
        %v366 = vmul.f32 %v362, 1.442695
        %v367 = vpow.pop %v366
        %v368 = vmul.f32 %v363, 1.442695
        %v369 = vpow.pop %v368
        %v370 = vmul.f32 %v364, 1.442695
        %v371 = vpow.pop %v370
        %v372 = vmul.f32 %v365, 1.442695
        %v373 = vpow.pop %v372
        %v374 = vsel %vm247, %v367, 0.0
        %375 = vadd.xlane.f32.xlu0 %v374
        %v376 = vpop.xlane.xlu0 %375
        %v377 = vsel %vm247, %v369, 0.0
        %378 = vadd.xlane.f32.xlu0 %v377
        %v379 = vpop.xlane.xlu0 %378
        %v380 = vsel %vm247, %v371, 0.0
        %381 = vadd.xlane.f32.xlu0 %v380
        %v382 = vpop.xlane.xlu0 %381
        %v383 = vsel %vm247, %v373, 0.0
        %384 = vadd.xlane.f32.xlu0 %v383
        %v385 = vpop.xlane.xlu0 %384
        %v386 = vrcp.pop %v376
        %v387 = vrcp.pop %v379
        %v388 = vrcp.pop %v382
        %v389 = vrcp.pop %v385
        %v390 = vmul.f32 %v367, %v386
        %v391 = vmul.f32 %v369, %v387
        %v392 = vmul.f32 %v371, %v388
        %v393 = vmul.f32 %v373, %v389
        %394 = vrot.lane.b32.xlu0 %v236, 64
        %v395 = vpop.permute.xlu0 %394
        %v398 = vsel %vm247, %v390, 0
        %400 = vmatpush.msra.mxu0 0.0
        %401 = vmatpush.msra.mxu0 0.0
        %402 = vmatpush.msra.mxu0 0.0
        %403 = vmatpush.msra.mxu0 0.0
        %404 = vmatpush.msra.mxu0 0.0
        %405 = vmatpush.msra.mxu0 0.0
        %406 = vmatpush.msra.mxu0 0.0
        %407 = vmatpush.msra.mxu0 0.0
        %408 = vmatpush.msra.mxu0 0.0
        %409 = vmatpush.msra.mxu0 0.0
        %410 = vmatpush.msra.mxu0 0.0
        %411 = vmatpush.msra.mxu0 0.0
        %412 = vmatpush.msra.mxu0 0.0
        %413 = vmatpush.msra.mxu0 0.0
        %414 = vmatpush.msra.mxu0 0.0
        %415 = vmatpush.msra.mxu0 %v395
        %416 = vmatmul.f32.gmra.mxu0 %v398
        %v417 = vpop.f32.mrf.mxu0
        %v418 = vadd.f32 0.0, %v417
        %419 = vdwg.mxu0
        %420 = vrot.lane.b32.xlu0 %v240, 64
        %v421 = vpop.permute.xlu0 %420
        %v424 = vsel %vm247, %v391, 0
        %426 = vmatpush.msra.mxu0 0.0
        %427 = vmatpush.msra.mxu0 0.0
        %428 = vmatpush.msra.mxu0 0.0
        %429 = vmatpush.msra.mxu0 0.0
        %430 = vmatpush.msra.mxu0 0.0
        %431 = vmatpush.msra.mxu0 0.0
        %432 = vmatpush.msra.mxu0 0.0
        %433 = vmatpush.msra.mxu0 0.0
        %434 = vmatpush.msra.mxu0 0.0
        %435 = vmatpush.msra.mxu0 0.0
        %436 = vmatpush.msra.mxu0 0.0
        %437 = vmatpush.msra.mxu0 0.0
        %438 = vmatpush.msra.mxu0 0.0
        %439 = vmatpush.msra.mxu0 0.0
        %440 = vmatpush.msra.mxu0 0.0
        %441 = vmatpush.msra.mxu0 %v421
        %442 = vmatmul.f32.gmra.mxu0 %v424
        %v443 = vpop.f32.mrf.mxu0
        %v444 = vadd.f32 0.0, %v443
        %445 = vdwg.mxu0
        %446 = vrot.lane.b32.xlu0 %v242, 64
        %v447 = vpop.permute.xlu0 %446
        %v450 = vsel %vm247, %v392, 0
        %452 = vmatpush.msra.mxu0 0.0
        %453 = vmatpush.msra.mxu0 0.0
        %454 = vmatpush.msra.mxu0 0.0
        %455 = vmatpush.msra.mxu0 0.0
        %456 = vmatpush.msra.mxu0 0.0
        %457 = vmatpush.msra.mxu0 0.0
        %458 = vmatpush.msra.mxu0 0.0
        %459 = vmatpush.msra.mxu0 0.0
        %460 = vmatpush.msra.mxu0 0.0
        %461 = vmatpush.msra.mxu0 0.0
        %462 = vmatpush.msra.mxu0 0.0
        %463 = vmatpush.msra.mxu0 0.0
        %464 = vmatpush.msra.mxu0 0.0
        %465 = vmatpush.msra.mxu0 0.0
        %466 = vmatpush.msra.mxu0 0.0
        %467 = vmatpush.msra.mxu0 %v447
        %468 = vmatmul.f32.gmra.mxu0 %v450
        %v469 = vpop.f32.mrf.mxu0
        %v470 = vadd.f32 0.0, %v469
        %471 = vdwg.mxu0
        %472 = vrot.lane.b32.xlu0 %v244, 64
        %v473 = vpop.permute.xlu0 %472
        %v476 = vsel %vm247, %v393, 0
        %478 = vmatpush.msra.mxu0 0.0
        %479 = vmatpush.msra.mxu0 0.0
        %480 = vmatpush.msra.mxu0 0.0
        %481 = vmatpush.msra.mxu0 0.0
        %482 = vmatpush.msra.mxu0 0.0
        %483 = vmatpush.msra.mxu0 0.0
        %484 = vmatpush.msra.mxu0 0.0
        %485 = vmatpush.msra.mxu0 0.0
        %486 = vmatpush.msra.mxu0 0.0
        %487 = vmatpush.msra.mxu0 0.0
        %488 = vmatpush.msra.mxu0 0.0
        %489 = vmatpush.msra.mxu0 0.0
        %490 = vmatpush.msra.mxu0 0.0
        %491 = vmatpush.msra.mxu0 0.0
        %492 = vmatpush.msra.mxu0 0.0
        %493 = vmatpush.msra.mxu0 %v473
        %494 = vmatmul.f32.gmra.mxu0 %v476
        %v495 = vpop.f32.mrf.mxu0
        %v496 = vadd.f32 0.0, %v495
        %497 = vdwg.mxu0
        %499 = vrot.lane.b32.xlu0 %v444, 8
        %v500 = vpop.permute.xlu0 %499
        %503 = vrot.lane.b32.xlu0 %v470, 16
        %v504 = vpop.permute.xlu0 %503
        %507 = vrot.lane.b32.xlu0 %v496, 24
        %v508 = vpop.permute.xlu0 %507
        %v510 = vsel %vm247, %v418, %v500
        %vm511 = vcmask 130048
        %v512 = vsel %vm511, %v510, %v504
        %vm513 = vcmask 195584
        %v514 = vsel %vm513, %v512, %v508
        %515 = vst.msk [vmem:[%s204] sm:$0xff] %vm214, %v514
        %s516 = sand.u32 %s97, 1
        %s517 = scalar_lea.sflag [#allocation4], %s516
        %s518 = sand.u32 %s97, 1
        %s519 = smul.addr %s518, 8
        %s520 = scalar_lea.vmem [#allocation7], %s519
        // Predicated region
        $region41: #{tpu_custom_call.1} parent=31 // pred_check
          %p521 = pneg %p107
        $region42: #{tpu_custom_call.1} parent=31 // pred_check_branch
          %523 = sbr.rel (%p521) target = $region44
        $region43: #{tpu_custom_call.1} parent=31 // pred_region
          %525 = vsyncadd %s517, 0
          %s526 = smul.addr %s21, 8
          %s527 = scalar_lea.hbm %s3, %s526
          %s529 = sshll.u32 %s520, 4
          %s530 = int_to_ptr.vmem [resolvable:$true] %s529
          %s531 = sshll.u32 %s527, 4
          %s532 = int_to_ptr.hbm [resolvable:$true] %s531
          %534 = dma.vmem_to_hbm [thread:$0]  %s530, 128, %s532, %s517
        $region44: #{tpu_custom_call.1} parent=31 // pred_fallthru
          _
      $region32: #{tpu_custom_call.1} parent=5 // pred_fallthru
        _
      %p535 = scmp.le.s32.totalorder 2, %s16
      // Predicated region
      $region45: #{tpu_custom_call.1} parent=5 // pred_check
        %p536 = pneg %p535
      $region46: #{tpu_custom_call.1} parent=5 // pred_check_branch
        %538 = sbr.rel (%p536) target = $region48
      $region47: #{tpu_custom_call.1} parent=5 // pred_region
        %s539 = ssub.s32 %s16, 2
        // Predicated region
        $region49: #{tpu_custom_call.1} parent=47 // pred_check
          %p540 = pneg %p113
        $region50: #{tpu_custom_call.1} parent=47 // pred_check_branch
          %542 = sbr.rel (%p540) target = $region52
        $region51: #{tpu_custom_call.1} parent=47 // pred_region
          %s543 = sand.u32 %s98, 1
          %s544 = scalar_lea.sflag [#allocation4], %s543
          %s545 = sand.u32 %s98, 1
          %s546 = smul.addr %s545, 8
          %s547 = scalar_lea.vmem [#allocation7], %s546
          %549 = dma.done %s544, 128
        $region52: #{tpu_custom_call.1} parent=47 // pred_fallthru
          _
      $region48: #{tpu_custom_call.1} parent=5 // pred_fallthru
        _
    $region6: #{tpu_custom_call.1} parent=1 // loop_footer
      %s20 = sadd.s32 1, %s16
    $region7: #{tpu_custom_call.1} parent=1 // loop_footer_branch
      %15 = sbr.rel target = $region3
    $region8: #{tpu_custom_call.1} parent=1 // loop_exit
      _
    %550 = vsyncpa [#allocation3], 1
    %s551 = scalar_lea.sflag [#allocation3], 1
    %552 = vsyncpa %s551, 1
    %553 = vsyncpa [#allocation6], 1
    %554 = vsyncpa [#allocation4], 1
    %s555 = scalar_lea.sflag [#allocation4], 1
    %556 = vsyncpa %s555, 1

</llo_original>
